<compile_context>
chip_gen: v6e
topology: v6e:2x2x1
jax: 0.10.0
libtpu: 0.0.40
codegen_flags: <defaults>
</compile_context>

<pallas_src>
import functools

import jax
import jax.numpy as jnp
from jax.experimental import pallas as pl
from jax.experimental.pallas import tpu as pltpu


# ----------------------------- Pallas kernel --------------------------------

def _decoder_step_kernel(
    s_valid,        # python int: number of valid (unpadded) encoder positions
    approx_recip,   # python bool: use EUP approximate reciprocal in softmax
    emb_ref,        # (TB, Ep)         embedded tokens (f32)
    h_ref,          # (TB, Hp)         previous hidden state (f32)
    enc_ref,        # (TB, Sp, EHSp)   encoder outputs (matmul dtype)
    wa_h_ref,       # (Hp, Hp)         attention weight, hidden part
    wa_e_ref,       # (EHSp, Hp)       attention weight, encoder part
    ba_ref,         # (1, Hp)          attention bias (f32)
    v_ref,          # (1, Hp)          attention score vector (f32, VPU use)
    wih_c_ref,      # (EHSp, 3*Hp)     GRU input weights (context part)
    wih_e_ref,      # (Ep, 3*Hp)       GRU input weights (embedding part)
    whh_ref,        # (Hp, 3*Hp)       GRU hidden weights
    bih_ref,        # (1, 3*Hp)        (f32)
    bhh_ref,        # (1, 3*Hp)        (f32)
    wfc_ref,        # (Hp, V_TILE)     output projection tile
    bfc_ref,        # (1, V_TILE)      (f32)
    pred_ref,       # (TB, V_TILE)     out
    hnew_ref,       # (TB, Hp)         out
    hacc_ref,       # (TB, Hp)         VMEM scratch: h_new cached across vj
):
    f32 = jnp.float32
    vj = pl.program_id(1)

    def mm(a, w_ref):
        w = w_ref[...]
        return jnp.dot(a.astype(w.dtype), w, preferred_element_type=f32)

    # Attention + GRU only once per batch tile (vj == 0); reused for all V tiles.
    @pl.when(vj == 0)
    def _():
        h = h_ref[...]                                  # (TB, Hp) f32
        emb = emb_ref[...]                              # (TB, Ep) f32
        enc = enc_ref[...]                              # (TB, Sp, EHSp)
        tb, sp, ehsp = enc.shape
        hp = h.shape[1]

        # ---- Bahdanau attention: energy = tanh([h_rep ; enc] @ W_a + b_a) ----
        # Split W_a => one big (TB*Sp, EHSp)@(EHSp, Hp) matmul + a broadcast-
        # added (TB, Hp)@(Hp, Hp) matmul (no concat / no per-row M=1 matmuls).
        e_enc = mm(enc.reshape(tb * sp, ehsp), wa_e_ref).reshape(tb, sp, hp)
        e_hid = mm(h, wa_h_ref)                         # (TB, Hp)
        energy = jnp.tanh(e_enc + e_hid[:, None, :] + ba_ref[...])   # (TB,Sp,Hp)

        # scores on the VPU/XLU (multiply + lane reduce), lane-dense (TB, Sp).
        # The +b_v bias of the reference is a constant shift -> cancels in
        # softmax and is intentionally omitted.
        scores = jnp.sum(energy * v_ref[...], axis=-1)  # (TB, Sp)
        if s_valid < sp:                                # mask padded positions
            col = jax.lax.broadcasted_iota(jnp.int32, scores.shape, 1)
            scores = jnp.where(col < s_valid, scores, -1e30)

        m = jnp.max(scores, axis=-1, keepdims=True)
        e = jnp.exp(scores - m)
        denom = jnp.sum(e, axis=-1, keepdims=True)
        alpha = e * pl.reciprocal(denom, approx=approx_recip)        # (TB, Sp)

        # weighted sum of encoder states
        context = jnp.sum(alpha[..., None] * enc.astype(f32), axis=1)  # (TB,EHSp)

        # ---- GRU cell (PyTorch gate order r, z, n); gates padded to Hp ----
        gi = mm(context, wih_c_ref) + mm(emb, wih_e_ref) + bih_ref[...]
        gh = mm(h, whh_ref) + bhh_ref[...]
        r = jax.nn.sigmoid(gi[:, 0:hp] + gh[:, 0:hp])
        z = jax.nn.sigmoid(gi[:, hp:2 * hp] + gh[:, hp:2 * hp])
        n = jnp.tanh(gi[:, 2 * hp:3 * hp] + r * gh[:, 2 * hp:3 * hp])
        h_new = (1.0 - z) * n + z * h                   # (TB, Hp)

        hacc_ref[...] = h_new
        hnew_ref[...] = h_new

    # ---- output projection for this V tile ----
    h_new = hacc_ref[...]
    pred_ref[...] = mm(h_new, wfc_ref) + bfc_ref[...]


# ------------------------------ wrapper --------------------------------------

def _round_up(x, m):
    return ((x + m - 1) // m) * m


def _pad2(x, shape):
    return jnp.pad(x, [(0, t - s) for s, t in zip(x.shape, shape)])


def document_decoder_attention(x_tokens, hidden, encoder_output, params, *,
                               matmul_dtype=jnp.bfloat16,
                               tile_b=128, v_tile_target=2048,
                               approx_recip=True):
    """One decoder step.

    x_tokens:       (B,) int32
    hidden:         (1, B, H) float32
    encoder_output: (S, B, EHS) float32
    returns (predictions (B, V), hidden' (1, B, H))
    """
    B = x_tokens.shape[0]
    S, _, EHS = encoder_output.shape
    H = hidden.shape[-1]
    E = params["embedding"].shape[1]
    V = params["W_fc"].shape[0]

    f32 = jnp.float32
    wd = matmul_dtype

    # TPU-aligned padded dims: last dim -> 128 lanes, second-last -> 8 sublanes.
    Hp = _round_up(H, 128)
    Ep = _round_up(E, 128)
    EHSp = _round_up(EHS, 128)
    Sp = _round_up(S, 8)
    tile_b = min(tile_b, _round_up(B, 8))
    Bp = _round_up(B, tile_b)
    v_tile = min(v_tile_target, _round_up(V, 128))
    Vp = _round_up(V, v_tile)

    # --------- plain-JAX glue: embedding gather, layout, weight prep ----------
    # TODO(synk): training-mode Dropout(0.5) on the embedding is not applied
    # (eval-mode identity assumed).
    emb = _pad2(params["embedding"][x_tokens].astype(f32), (Bp, Ep))   # (Bp,Ep)
    h0 = _pad2(hidden[0].astype(f32), (Bp, Hp))                        # (Bp,Hp)
    enc = jnp.transpose(encoder_output, (1, 0, 2))                     # (B,S,EHS)
    enc = jnp.pad(enc, ((0, Bp - B), (0, Sp - S), (0, EHSp - EHS))).astype(wd)

    # attention Linear(dhs+ehs -> dhs) over cat([hidden, enc]); split the weight.
    W_a = params["W_a"]
    wa_h = _pad2(W_a[:H, :], (Hp, Hp)).astype(wd)
    wa_e = _pad2(W_a[H:, :], (EHSp, Hp)).astype(wd)
    ba = _pad2(params["b_a"][None, :], (1, Hp)).astype(f32)
    v_row = _pad2(params["v_a"].reshape(1, H), (1, Hp)).astype(f32)
    # b_v (scalar bias applied before softmax) cancels in softmax -> dropped.

    # GRU: PyTorch computes x @ W_ih^T; rnn_inp = cat([context, emb]).
    # Pad each gate (r, z, n) separately to Hp so gate slices are lane-aligned.
    def pad_gate_cols(w_t, in_pad):                     # w_t: (in, 3H)
        gates = [_pad2(w_t[:, g * H:(g + 1) * H], (in_pad, Hp)) for g in range(3)]
        return jnp.concatenate(gates, axis=1)           # (in_pad, 3*Hp)

    wih_t = params["W_ih"].T                            # (EHS+E, 3H)
    wih_c = pad_gate_cols(wih_t[:EHS, :], EHSp).astype(wd)
    wih_e = pad_gate_cols(wih_t[EHS:, :], Ep).astype(wd)
    whh = pad_gate_cols(params["W_hh"].T, Hp).astype(wd)

    def pad_gate_bias(b):                               # (3H,)
        return jnp.concatenate(
            [_pad2(b[None, g * H:(g + 1) * H], (1, Hp)) for g in range(3)], axis=1)

    bih = pad_gate_bias(params["b_ih"]).astype(f32)
    bhh = pad_gate_bias(params["b_hh"]).astype(f32)

    wfc = _pad2(params["W_fc"].T, (Hp, Vp)).astype(wd)  # (Hp, Vp)
    bfc = _pad2(params["b_fc"][None, :], (1, Vp)).astype(f32)

    grid = (Bp // tile_b, Vp // v_tile)

    def const(shape):
        nd = len(shape)
        return pl.BlockSpec(shape, lambda bi, vj, nd=nd: (0,) * nd)

    in_specs = [
        pl.BlockSpec((tile_b, Ep), lambda bi, vj: (bi, 0)),         # emb
        pl.BlockSpec((tile_b, Hp), lambda bi, vj: (bi, 0)),         # hidden
        pl.BlockSpec((tile_b, Sp, EHSp), lambda bi, vj: (bi, 0, 0)),  # enc
        const(wa_h.shape), const(wa_e.shape), const(ba.shape), const(v_row.shape),
        const(wih_c.shape), const(wih_e.shape), const(whh.shape),
        const(bih.shape), const(bhh.shape),
        pl.BlockSpec((Hp, v_tile), lambda bi, vj: (0, vj)),         # W_fc tile
        pl.BlockSpec((1, v_tile), lambda bi, vj: (0, vj)),          # b_fc tile
    ]
    out_specs = [
        pl.BlockSpec((tile_b, v_tile), lambda bi, vj: (bi, vj)),    # predictions
        pl.BlockSpec((tile_b, Hp), lambda bi, vj: (bi, 0)),         # new hidden
    ]
    out_shape = (
        jax.ShapeDtypeStruct((Bp, Vp), f32),
        jax.ShapeDtypeStruct((Bp, Hp), f32),
    )

    # Advisory cost estimate so XLA schedules the surrounding gather/transposes.
    flops = 2 * Bp * (Sp * EHSp * Hp + Hp * Hp + Sp * Hp
                      + (EHSp + Ep + Hp) * 3 * Hp + Hp * Vp)
    trans = Bp * (Sp * Hp + 2 * Sp + 3 * Hp)
    operands = (emb, h0, enc, wa_h, wa_e, ba, v_row,
                wih_c, wih_e, whh, bih, bhh, wfc, bfc)
    bytes_acc = (sum(int(a.size) * a.dtype.itemsize for a in operands)
                 + Bp * Vp * 4 + Bp * Hp * 4)

    preds, h_new = pl.pallas_call(
        functools.partial(_decoder_step_kernel, S, approx_recip),
        grid_spec=pltpu.PrefetchScalarGridSpec(
            num_scalar_prefetch=0,
            grid=grid,
            in_specs=in_specs,
            out_specs=out_specs,
            scratch_shapes=[pltpu.VMEM((tile_b, Hp), f32)]),
        out_shape=out_shape,
        compiler_params=pltpu.CompilerParams(
            dimension_semantics=("parallel", "arbitrary"),
            vmem_limit_bytes=32 * 1024 * 1024),
        cost_estimate=pl.CostEstimate(
            flops=int(flops), transcendentals=int(trans),
            bytes_accessed=int(bytes_acc)),
    )(*operands)

    return preds[:B, :V], h_new[:B, :H][None]           # (B, V), (1, B, H)


# --------------------------- pure-JAX reference -------------------------------

def reference(x_tokens, hidden, encoder_output, params):
    H = hidden.shape[-1]
    emb = params["embedding"][x_tokens]                 # (B, E)
    h = hidden[0]                                       # (B, H)
    enc = jnp.transpose(encoder_output, (1, 0, 2))      # (B, S, EHS)
    B, S, _ = enc.shape

    h_rep = jnp.broadcast_to(h[:, None, :], (B, S, H))
    energy = jnp.tanh(
        jnp.concatenate([h_rep, enc], axis=-1) @ params["W_a"] + params["b_a"])
    scores = (energy @ params["v_a"])[..., 0] + params["b_v"]
    alpha = jax.nn.softmax(scores, axis=1)              # (B, S)
    context = jnp.einsum("bs,bse->be", alpha, enc)      # (B, EHS)

    x_in = jnp.concatenate([context, emb], axis=-1)
    gi = x_in @ params["W_ih"].T + params["b_ih"]
    gh = h @ params["W_hh"].T + params["b_hh"]
    r = jax.nn.sigmoid(gi[:, :H] + gh[:, :H])
    z = jax.nn.sigmoid(gi[:, H:2 * H] + gh[:, H:2 * H])
    n = jnp.tanh(gi[:, 2 * H:] + r * gh[:, 2 * H:])
    h_new = (1.0 - z) * n + z * h
    preds = h_new @ params["W_fc"].T + params["b_fc"]
    return preds, h_new[None]


# ------------------------------ param init -----------------------------------

def init_params(key, vocab_size, embed_size, hidden_size, encoder_hidden_size):
    ks = jax.random.split(key, 12)
    H, E, EHS, V = hidden_size, embed_size, encoder_hidden_size, vocab_size

    def u(k, shape, scale):
        return jax.random.uniform(k, shape, jnp.float32, -scale, scale)

    gru_in = E + EHS
    return {
        "embedding": u(ks[0], (V, E), 1.0),
        # BeforeRNNAttention: Linear(dhs+ehs -> dhs) + v: Linear(dhs -> 1)
        "W_a": u(ks[1], (H + EHS, H), (H + EHS) ** -0.5),
        "b_a": u(ks[2], (H,), (H + EHS) ** -0.5),
        "v_a": u(ks[3], (H, 1), H ** -0.5),
        "b_v": u(ks[4], (), H ** -0.5),
        # GRU(embed_size + encoder_hidden_size -> hidden_size), gate order r,z,n
        "W_ih": u(ks[5], (3 * H, gru_in), H ** -0.5),
        "W_hh": u(ks[6], (3 * H, H), H ** -0.5),
        "b_ih": u(ks[7], (3 * H,), H ** -0.5),
        "b_hh": u(ks[8], (3 * H,), H ** -0.5),
        # fc1: Linear(hidden_size -> vocab_size)
        "W_fc": u(ks[9], (V, H), H ** -0.5),
        "b_fc": u(ks[10], (V,), H ** -0.5),
    }


# --------------------------------- main ---------------------------------------

if __name__ == "__main__":
    B, S = 2, 8
    vocab_size, embed_size, hidden_size, encoder_hidden_size = 32, 16, 32, 32

    key = jax.random.PRNGKey(0)
    kp, kx, kh, ke = jax.random.split(key, 4)

    params = init_params(kp, vocab_size, embed_size, hidden_size,
                         encoder_hidden_size)
    x_tokens = jax.random.randint(kx, (B,), 0, vocab_size, dtype=jnp.int32)
    hidden = jax.random.normal(kh, (1, B, hidden_size), jnp.float32)
    encoder_output = jax.random.normal(
        ke, (S, B, encoder_hidden_size), jnp.float32)

    ref_preds, ref_h = reference(x_tokens, hidden, encoder_output, params)

    # --- f32 matmul path, exact softmax reciprocal: tight correctness check ---
    preds, h_new = document_decoder_attention(
        x_tokens, hidden, encoder_output, params,
        matmul_dtype=jnp.float32, approx_recip=False)
    jax.block_until_ready((preds, h_new))
    assert preds.shape == (B, vocab_size)
    assert h_new.shape == (1, B, hidden_size)
    assert jnp.allclose(preds, ref_preds, rtol=1e-4, atol=1e-4)
    assert jnp.allclose(h_new, ref_h, rtol=1e-4, atol=1e-4)

    # --- default perf path (bf16 MXU operands, EUP approx reciprocal) ---------
    preds_bf, h_bf = document_decoder_attention(
        x_tokens, hidden, encoder_output, params)
    jax.block_until_ready((preds_bf, h_bf))
    assert jnp.allclose(preds_bf, ref_preds, rtol=7e-2, atol=7e-2)
    assert jnp.allclose(h_bf, ref_h, rtol=7e-2, atol=7e-2)

    print("KERNEL_OK")
</pallas_src>

<mosaic_0001>
module attributes {stable_mosaic.version = 11 : i64} {
  func.func @_decoder_step_kernel(%arg0: i32, %arg1: i32, %arg2: memref<8x128xf32, #tpu.memory_space<vmem>>, %arg3: memref<8x128xf32, #tpu.memory_space<vmem>>, %arg4: memref<8x8x128xf32, #tpu.memory_space<vmem>>, %arg5: memref<128x128xf32, #tpu.memory_space<vmem>>, %arg6: memref<128x128xf32, #tpu.memory_space<vmem>>, %arg7: memref<1x128xf32, #tpu.memory_space<vmem>>, %arg8: memref<1x128xf32, #tpu.memory_space<vmem>>, %arg9: memref<128x384xf32, #tpu.memory_space<vmem>>, %arg10: memref<128x384xf32, #tpu.memory_space<vmem>>, %arg11: memref<128x384xf32, #tpu.memory_space<vmem>>, %arg12: memref<1x384xf32, #tpu.memory_space<vmem>>, %arg13: memref<1x384xf32, #tpu.memory_space<vmem>>, %arg14: memref<128x128xf32, #tpu.memory_space<vmem>>, %arg15: memref<1x128xf32, #tpu.memory_space<vmem>>, %arg16: memref<8x128xf32, #tpu.memory_space<vmem>>, %arg17: memref<8x128xf32, #tpu.memory_space<vmem>>, %arg18: memref<8x128xf32, #tpu.memory_space<vmem>>) attributes {dimension_semantics = [#tpu.dimension_semantics<parallel>, #tpu.dimension_semantics<arbitrary>], iteration_bounds = array<i64: 1, 1>, scalar_prefetch = 0 : i64, scratch_operands = 1 : i64, tpu.core_type = #tpu.core_type<tc>, window_params = [{transform_indices = @transform_0, window_bounds = array<i64: 8, 128>}, {transform_indices = @transform_1, window_bounds = array<i64: 8, 128>}, {transform_indices = @transform_2, window_bounds = array<i64: 8, 8, 128>}, {pipeline_mode = #tpu.pipeline_mode<synchronous>, transform_indices = @transform_3, window_bounds = array<i64: 128, 128>}, {pipeline_mode = #tpu.pipeline_mode<synchronous>, transform_indices = @transform_4, window_bounds = array<i64: 128, 128>}, {pipeline_mode = #tpu.pipeline_mode<synchronous>, transform_indices = @transform_5, window_bounds = array<i64: 1, 128>}, {pipeline_mode = #tpu.pipeline_mode<synchronous>, transform_indices = @transform_6, window_bounds = array<i64: 1, 128>}, {pipeline_mode = #tpu.pipeline_mode<synchronous>, transform_indices = @transform_7, window_bounds = array<i64: 128, 384>}, {pipeline_mode = #tpu.pipeline_mode<synchronous>, transform_indices = @transform_8, window_bounds = array<i64: 128, 384>}, {pipeline_mode = #tpu.pipeline_mode<synchronous>, transform_indices = @transform_9, window_bounds = array<i64: 128, 384>}, {pipeline_mode = #tpu.pipeline_mode<synchronous>, transform_indices = @transform_10, window_bounds = array<i64: 1, 384>}, {pipeline_mode = #tpu.pipeline_mode<synchronous>, transform_indices = @transform_11, window_bounds = array<i64: 1, 384>}, {transform_indices = @transform_12, window_bounds = array<i64: 128, 128>}, {transform_indices = @transform_13, window_bounds = array<i64: 1, 128>}, {transform_indices = @transform_14, window_bounds = array<i64: 8, 128>}, {transform_indices = @transform_15, window_bounds = array<i64: 8, 128>}]} {
    %c0_i32 = arith.constant 0 : i32
    %0 = arith.cmpi eq, %arg1, %c0_i32 : i32
    %1 = arith.extui %0 : i1 to i32
    %c0_i32_0 = arith.constant 0 : i32
    %2 = arith.cmpi ne, %1, %c0_i32_0 : i32
    scf.if %2 {
      %c0_8 = arith.constant 0 : index
      %c0_9 = arith.constant 0 : index
      %10 = vector.load %arg3[%c0_8, %c0_9] : memref<8x128xf32, #tpu.memory_space<vmem>>, vector<8x128xf32>
      %c0_10 = arith.constant 0 : index
      %c0_11 = arith.constant 0 : index
      %11 = vector.load %arg2[%c0_10, %c0_11] : memref<8x128xf32, #tpu.memory_space<vmem>>, vector<8x128xf32>
      %c0_12 = arith.constant 0 : index
      %c0_13 = arith.constant 0 : index
      %c0_14 = arith.constant 0 : index
      %12 = vector.load %arg4[%c0_12, %c0_13, %c0_14] : memref<8x8x128xf32, #tpu.memory_space<vmem>>, vector<8x8x128xf32>
      %13 = vector.shape_cast %12 : vector<8x8x128xf32> to vector<64x128xf32>
      %c0_15 = arith.constant 0 : index
      %c0_16 = arith.constant 0 : index
      %14 = vector.load %arg6[%c0_15, %c0_16] : memref<128x128xf32, #tpu.memory_space<vmem>>, vector<128x128xf32>
      %cst_17 = arith.constant dense<0.000000e+00> : vector<64x128xf32>
      %15 = tpu.matmul %13, %14, %cst_17 {dimension_numbers = #tpu.dot_dimension_numbers<[1], [0], [0], [1], [0, 0, 1, 1], [], []>} : vector<64x128xf32>, vector<128x128xf32>, vector<64x128xf32> -> vector<64x128xf32>
      %16 = vector.shape_cast %15 : vector<64x128xf32> to vector<8x8x128xf32>
      %c0_18 = arith.constant 0 : index
      %c0_19 = arith.constant 0 : index
      %17 = vector.load %arg5[%c0_18, %c0_19] : memref<128x128xf32, #tpu.memory_space<vmem>>, vector<128x128xf32>
      %cst_20 = arith.constant dense<0.000000e+00> : vector<8x128xf32>
      %18 = tpu.matmul %10, %17, %cst_20 {dimension_numbers = #tpu.dot_dimension_numbers<[1], [0], [0], [1], [0, 0, 1, 1], [], []>} : vector<8x128xf32>, vector<128x128xf32>, vector<8x128xf32> -> vector<8x128xf32>
      %19 = vector.shape_cast %18 : vector<8x128xf32> to vector<8x1x128xf32>
      %20 = vector.broadcast %19 : vector<8x1x128xf32> to vector<8x8x128xf32>
      %21 = arith.addf %16, %20 : vector<8x8x128xf32>
      %c0_21 = arith.constant 0 : index
      %c0_22 = arith.constant 0 : index
      %22 = vector.load %arg7[%c0_21, %c0_22] : memref<1x128xf32, #tpu.memory_space<vmem>>, vector<1x128xf32>
      %23 = vector.shape_cast %22 : vector<1x128xf32> to vector<1x1x128xf32>
      %24 = vector.broadcast %23 : vector<1x1x128xf32> to vector<8x8x128xf32>
      %25 = arith.addf %21, %24 : vector<8x8x128xf32>
      %26 = math.tanh %25 : vector<8x8x128xf32>
      %c0_23 = arith.constant 0 : index
      %c0_24 = arith.constant 0 : index
      %27 = vector.load %arg8[%c0_23, %c0_24] : memref<1x128xf32, #tpu.memory_space<vmem>>, vector<1x128xf32>
      %28 = vector.shape_cast %27 : vector<1x128xf32> to vector<1x1x128xf32>
      %29 = vector.broadcast %28 : vector<1x1x128xf32> to vector<8x8x128xf32>
      %30 = arith.mulf %26, %29 : vector<8x8x128xf32>
      %cst_25 = arith.constant dense<0.000000e+00> : vector<8x8xf32>
      %31 = vector.multi_reduction <add>, %30, %cst_25 [2] : vector<8x8x128xf32> to vector<8x8xf32>
      %cst_26 = arith.constant dense<0xFF800000> : vector<8xf32>
      %32 = vector.multi_reduction <maximumf>, %31, %cst_26 [1] : vector<8x8xf32> to vector<8xf32>
      %33 = vector.shape_cast %32 : vector<8xf32> to vector<8x1xf32>
      %34 = vector.broadcast %33 : vector<8x1xf32> to vector<8x8xf32>
      %35 = arith.subf %31, %34 : vector<8x8xf32>
      %36 = math.exp %35 : vector<8x8xf32>
      %cst_27 = arith.constant dense<0.000000e+00> : vector<8xf32>
      %37 = vector.multi_reduction <add>, %36, %cst_27 [1] : vector<8x8xf32> to vector<8xf32>
      %38 = vector.shape_cast %37 : vector<8xf32> to vector<8x1xf32>
      %39 = tpu.reciprocal %38 : vector<8x1xf32> -> vector<8x1xf32>
      %40 = vector.broadcast %39 : vector<8x1xf32> to vector<8x8xf32>
      %41 = arith.mulf %36, %40 : vector<8x8xf32>
      %42 = vector.shape_cast %41 : vector<8x8xf32> to vector<8x8x1xf32>
      %43 = vector.broadcast %42 : vector<8x8x1xf32> to vector<8x8x128xf32>
      %44 = arith.mulf %43, %12 : vector<8x8x128xf32>
      %cst_28 = arith.constant dense<0.000000e+00> : vector<8x128xf32>
      %45 = vector.multi_reduction <add>, %44, %cst_28 [1] : vector<8x8x128xf32> to vector<8x128xf32>
      %c0_29 = arith.constant 0 : index
      %c0_30 = arith.constant 0 : index
      %46 = vector.load %arg9[%c0_29, %c0_30] : memref<128x384xf32, #tpu.memory_space<vmem>>, vector<128x384xf32>
      %cst_31 = arith.constant dense<0.000000e+00> : vector<8x384xf32>
      %47 = tpu.matmul %45, %46, %cst_31 {dimension_numbers = #tpu.dot_dimension_numbers<[1], [0], [0], [1], [0, 0, 1, 1], [], []>} : vector<8x128xf32>, vector<128x384xf32>, vector<8x384xf32> -> vector<8x384xf32>
      %c0_32 = arith.constant 0 : index
      %c0_33 = arith.constant 0 : index
      %48 = vector.load %arg10[%c0_32, %c0_33] : memref<128x384xf32, #tpu.memory_space<vmem>>, vector<128x384xf32>
      %cst_34 = arith.constant dense<0.000000e+00> : vector<8x384xf32>
      %49 = tpu.matmul %11, %48, %cst_34 {dimension_numbers = #tpu.dot_dimension_numbers<[1], [0], [0], [1], [0, 0, 1, 1], [], []>} : vector<8x128xf32>, vector<128x384xf32>, vector<8x384xf32> -> vector<8x384xf32>
      %50 = arith.addf %47, %49 : vector<8x384xf32>
      %c0_35 = arith.constant 0 : index
      %c0_36 = arith.constant 0 : index
      %51 = vector.load %arg12[%c0_35, %c0_36] : memref<1x384xf32, #tpu.memory_space<vmem>>, vector<1x384xf32>
      %52 = vector.broadcast %51 : vector<1x384xf32> to vector<8x384xf32>
      %53 = arith.addf %50, %52 : vector<8x384xf32>
      %c0_37 = arith.constant 0 : index
      %c0_38 = arith.constant 0 : index
      %54 = vector.load %arg11[%c0_37, %c0_38] : memref<128x384xf32, #tpu.memory_space<vmem>>, vector<128x384xf32>
      %cst_39 = arith.constant dense<0.000000e+00> : vector<8x384xf32>
      %55 = tpu.matmul %10, %54, %cst_39 {dimension_numbers = #tpu.dot_dimension_numbers<[1], [0], [0], [1], [0, 0, 1, 1], [], []>} : vector<8x128xf32>, vector<128x384xf32>, vector<8x384xf32> -> vector<8x384xf32>
      %c0_40 = arith.constant 0 : index
      %c0_41 = arith.constant 0 : index
      %56 = vector.load %arg13[%c0_40, %c0_41] : memref<1x384xf32, #tpu.memory_space<vmem>>, vector<1x384xf32>
      %57 = vector.broadcast %56 : vector<1x384xf32> to vector<8x384xf32>
      %58 = arith.addf %55, %57 : vector<8x384xf32>
      %59 = vector.extract_strided_slice %53 {offsets = [0, 0], sizes = [8, 128], strides = [1, 1]} : vector<8x384xf32> to vector<8x128xf32>
      %60 = vector.extract_strided_slice %58 {offsets = [0, 0], sizes = [8, 128], strides = [1, 1]} : vector<8x384xf32> to vector<8x128xf32>
      %61 = arith.addf %59, %60 : vector<8x128xf32>
      %62 = arith.negf %61 : vector<8x128xf32>
      %63 = math.exp %62 : vector<8x128xf32>
      %cst_42 = arith.constant 1.000000e+00 : f32
      %64 = vector.broadcast %cst_42 : f32 to vector<8x128xf32>
      %65 = arith.addf %64, %63 : vector<8x128xf32>
      %66 = arith.divf %64, %65 : vector<8x128xf32>
      %67 = vector.extract_strided_slice %53 {offsets = [0, 128], sizes = [8, 128], strides = [1, 1]} : vector<8x384xf32> to vector<8x128xf32>
      %68 = vector.extract_strided_slice %58 {offsets = [0, 128], sizes = [8, 128], strides = [1, 1]} : vector<8x384xf32> to vector<8x128xf32>
      %69 = arith.addf %67, %68 : vector<8x128xf32>
      %70 = arith.negf %69 : vector<8x128xf32>
      %71 = math.exp %70 : vector<8x128xf32>
      %cst_43 = arith.constant 1.000000e+00 : f32
      %72 = vector.broadcast %cst_43 : f32 to vector<8x128xf32>
      %73 = arith.addf %72, %71 : vector<8x128xf32>
      %74 = arith.divf %72, %73 : vector<8x128xf32>
      %75 = vector.extract_strided_slice %53 {offsets = [0, 256], sizes = [8, 128], strides = [1, 1]} : vector<8x384xf32> to vector<8x128xf32>
      %76 = vector.extract_strided_slice %58 {offsets = [0, 256], sizes = [8, 128], strides = [1, 1]} : vector<8x384xf32> to vector<8x128xf32>
      %77 = arith.mulf %66, %76 : vector<8x128xf32>
      %78 = arith.addf %75, %77 : vector<8x128xf32>
      %79 = math.tanh %78 : vector<8x128xf32>
      %cst_44 = arith.constant 1.000000e+00 : f32
      %80 = vector.broadcast %cst_44 : f32 to vector<8x128xf32>
      %81 = arith.subf %80, %74 : vector<8x128xf32>
      %82 = arith.mulf %81, %79 : vector<8x128xf32>
      %83 = arith.mulf %74, %10 : vector<8x128xf32>
      %84 = arith.addf %82, %83 : vector<8x128xf32>
      %c0_45 = arith.constant 0 : index
      %c0_46 = arith.constant 0 : index
      %85 = vector.load %arg18[%c0_45, %c0_46] : memref<8x128xf32, #tpu.memory_space<vmem>>, vector<8x128xf32>
      tpu.vector_store %arg18[%c0_45, %c0_46], %84 {strides = array<i32>} : memref<8x128xf32, #tpu.memory_space<vmem>>, vector<8x128xf32>,
      %c0_47 = arith.constant 0 : index
      %c0_48 = arith.constant 0 : index
      %86 = vector.load %arg17[%c0_47, %c0_48] : memref<8x128xf32, #tpu.memory_space<vmem>>, vector<8x128xf32>
      tpu.vector_store %arg17[%c0_47, %c0_48], %84 {strides = array<i32>} : memref<8x128xf32, #tpu.memory_space<vmem>>, vector<8x128xf32>,
    } else {
    }
    %c0 = arith.constant 0 : index
    %c0_1 = arith.constant 0 : index
    %3 = vector.load %arg18[%c0, %c0_1] : memref<8x128xf32, #tpu.memory_space<vmem>>, vector<8x128xf32>
    %c0_2 = arith.constant 0 : index
    %c0_3 = arith.constant 0 : index
    %4 = vector.load %arg14[%c0_2, %c0_3] : memref<128x128xf32, #tpu.memory_space<vmem>>, vector<128x128xf32>
    %cst = arith.constant dense<0.000000e+00> : vector<8x128xf32>
    %5 = tpu.matmul %3, %4, %cst {dimension_numbers = #tpu.dot_dimension_numbers<[1], [0], [0], [1], [0, 0, 1, 1], [], []>} : vector<8x128xf32>, vector<128x128xf32>, vector<8x128xf32> -> vector<8x128xf32>
    %c0_4 = arith.constant 0 : index
    %c0_5 = arith.constant 0 : index
    %6 = vector.load %arg15[%c0_4, %c0_5] : memref<1x128xf32, #tpu.memory_space<vmem>>, vector<1x128xf32>
    %7 = vector.broadcast %6 : vector<1x128xf32> to vector<8x128xf32>
    %8 = arith.addf %5, %7 : vector<8x128xf32>
    %c0_6 = arith.constant 0 : index
    %c0_7 = arith.constant 0 : index
    %9 = vector.load %arg16[%c0_6, %c0_7] : memref<8x128xf32, #tpu.memory_space<vmem>>, vector<8x128xf32>
    tpu.vector_store %arg16[%c0_6, %c0_7], %8 {strides = array<i32>} : memref<8x128xf32, #tpu.memory_space<vmem>>, vector<8x128xf32>,
    return
  }
  func.func @transform_0(%arg0: i32, %arg1: i32) -> (i32, i32) {
    %c0_i32 = arith.constant 0 : i32
    %c0_i32_0 = arith.constant 0 : i32
    return %arg0, %c0_i32 : i32, i32
  }
  func.func @transform_1(%arg0: i32, %arg1: i32) -> (i32, i32) {
    %c0_i32 = arith.constant 0 : i32
    %c0_i32_0 = arith.constant 0 : i32
    return %arg0, %c0_i32 : i32, i32
  }
  func.func @transform_2(%arg0: i32, %arg1: i32) -> (i32, i32, i32) {
    %c0_i32 = arith.constant 0 : i32
    %c0_i32_0 = arith.constant 0 : i32
    %c0_i32_1 = arith.constant 0 : i32
    return %arg0, %c0_i32, %c0_i32_0 : i32, i32, i32
  }
  func.func @transform_3(%arg0: i32, %arg1: i32) -> (i32, i32) {
    %c0_i32 = arith.constant 0 : i32
    %c0_i32_0 = arith.constant 0 : i32
    %c0_i32_1 = arith.constant 0 : i32
    return %c0_i32, %c0_i32_0 : i32, i32
  }
  func.func @transform_4(%arg0: i32, %arg1: i32) -> (i32, i32) {
    %c0_i32 = arith.constant 0 : i32
    %c0_i32_0 = arith.constant 0 : i32
    %c0_i32_1 = arith.constant 0 : i32
    return %c0_i32, %c0_i32_0 : i32, i32
  }
  func.func @transform_5(%arg0: i32, %arg1: i32) -> (i32, i32) {
    %c0_i32 = arith.constant 0 : i32
    %c0_i32_0 = arith.constant 0 : i32
    %c0_i32_1 = arith.constant 0 : i32
    return %c0_i32, %c0_i32_0 : i32, i32
  }
  func.func @transform_6(%arg0: i32, %arg1: i32) -> (i32, i32) {
    %c0_i32 = arith.constant 0 : i32
    %c0_i32_0 = arith.constant 0 : i32
    %c0_i32_1 = arith.constant 0 : i32
    return %c0_i32, %c0_i32_0 : i32, i32
  }
  func.func @transform_7(%arg0: i32, %arg1: i32) -> (i32, i32) {
    %c0_i32 = arith.constant 0 : i32
    %c0_i32_0 = arith.constant 0 : i32
    %c0_i32_1 = arith.constant 0 : i32
    return %c0_i32, %c0_i32_0 : i32, i32
  }
  func.func @transform_8(%arg0: i32, %arg1: i32) -> (i32, i32) {
    %c0_i32 = arith.constant 0 : i32
    %c0_i32_0 = arith.constant 0 : i32
    %c0_i32_1 = arith.constant 0 : i32
    return %c0_i32, %c0_i32_0 : i32, i32
  }
  func.func @transform_9(%arg0: i32, %arg1: i32) -> (i32, i32) {
    %c0_i32 = arith.constant 0 : i32
    %c0_i32_0 = arith.constant 0 : i32
    %c0_i32_1 = arith.constant 0 : i32
    return %c0_i32, %c0_i32_0 : i32, i32
  }
  func.func @transform_10(%arg0: i32, %arg1: i32) -> (i32, i32) {
    %c0_i32 = arith.constant 0 : i32
    %c0_i32_0 = arith.constant 0 : i32
    %c0_i32_1 = arith.constant 0 : i32
    return %c0_i32, %c0_i32_0 : i32, i32
  }
  func.func @transform_11(%arg0: i32, %arg1: i32) -> (i32, i32) {
    %c0_i32 = arith.constant 0 : i32
    %c0_i32_0 = arith.constant 0 : i32
    %c0_i32_1 = arith.constant 0 : i32
    return %c0_i32, %c0_i32_0 : i32, i32
  }
  func.func @transform_12(%arg0: i32, %arg1: i32) -> (i32, i32) {
    %c0_i32 = arith.constant 0 : i32
    %c0_i32_0 = arith.constant 0 : i32
    return %c0_i32, %arg1 : i32, i32
  }
  func.func @transform_13(%arg0: i32, %arg1: i32) -> (i32, i32) {
    %c0_i32 = arith.constant 0 : i32
    %c0_i32_0 = arith.constant 0 : i32
    return %c0_i32, %arg1 : i32, i32
  }
  func.func @transform_14(%arg0: i32, %arg1: i32) -> (i32, i32) {
    %c0_i32 = arith.constant 0 : i32
    return %arg0, %arg1 : i32, i32
  }
  func.func @transform_15(%arg0: i32, %arg1: i32) -> (i32, i32) {
    %c0_i32 = arith.constant 0 : i32
    %c0_i32_0 = arith.constant 0 : i32
    return %arg0, %c0_i32 : i32, i32
  }
}

</mosaic_0001>

<llo_original>
// kernel: tpu_custom_call.1
$region0: #{tpu_custom_call.1}
  #allocation0 [shape = 'u32[]', space=smem, size = 0x4, offset = 0x4, fixed_abs, tag = 'smem constant byte address 0x4 - core index']
  #allocation1 [shape = 'u32[144,128]{1,0:T(1,128)}', space=vmem, size = 0x12000, scoped, tag = 'internal scratch']
  #allocation2 [shape = 'f32[8,128]{1,0:T(8,128)}', space=vmem, size = 0x1000, scoped, tag = 'scratch operand']
  %s0 = inlined_call_operand.hbm [shape: f32[8,128], index: 0, kind: input, shape index: {}]
  %s1 = inlined_call_operand.hbm [shape: f32[8,128], index: 1, kind: input, shape index: {}]
  %s2 = inlined_call_operand.hbm [shape: f32[8,8,128], index: 2, kind: input, shape index: {}]
  %s3 = inlined_call_operand.hbm [shape: f32[128,128], index: 3, kind: input, shape index: {}]
  %s4 = inlined_call_operand.hbm [shape: f32[128,128], index: 4, kind: input, shape index: {}]
  %s5 = inlined_call_operand.vmem [shape: f32[1,128], index: 5, kind: input, shape index: {}]
  %s6 = inlined_call_operand.vmem [shape: f32[1,128], index: 6, kind: input, shape index: {}]
  %s7 = inlined_call_operand.hbm [shape: f32[128,384], index: 7, kind: input, shape index: {}]
  %s8 = inlined_call_operand.hbm [shape: f32[128,384], index: 8, kind: input, shape index: {}]
  %s9 = inlined_call_operand.hbm [shape: f32[128,384], index: 9, kind: input, shape index: {}]
  %s10 = inlined_call_operand.vmem [shape: f32[1,384], index: 10, kind: input, shape index: {}]
  %s11 = inlined_call_operand.vmem [shape: f32[1,384], index: 11, kind: input, shape index: {}]
  %s12 = inlined_call_operand.hbm [shape: f32[128,128], index: 12, kind: input, shape index: {}]
  %s13 = inlined_call_operand.vmem [shape: f32[1,128], index: 13, kind: input, shape index: {}]
  %s14 = inlined_call_operand.hbm [shape: f32[8,128], index: 14, kind: output, shape index: {0}]
  %s15 = inlined_call_operand.hbm [shape: f32[8,128], index: 15, kind: output, shape index: {1}]
  %16 = xla_tuple %s14, %s15
  %s17 = sld [smem:[#allocation0]]
  $region114: #{tpu_custom_call.1} parent=0
    _
  %s19 = ssub.s32 1, %s17
  %s20 = scalar_select 0, %s19, %s17
  $region1: #{tpu_custom_call.1} parent=0
    #allocation3 [shape = 'u8[4096]{0}', space=vmem, size = 0x1000, scoped, tag = 'input window, operand 0, single buffered']
    #allocation4 [shape = 's32[1]{0}', space=sflag, size = 0x4, scoped, tag = 'scoped memory for tpu_custom_call.1']
    #allocation5 [shape = 's32[1]{0}', space=sflag, size = 0x4, scoped, tag = 'scoped memory for tpu_custom_call.1']
    #allocation6 [shape = 'u8[4096]{0}', space=vmem, size = 0x1000, scoped, tag = 'input window, operand 1, single buffered']
    #allocation7 [shape = 's32[1]{0}', space=sflag, size = 0x4, scoped, tag = 'scoped memory for tpu_custom_call.1']
    #allocation8 [shape = 'u8[32768]{0}', space=vmem, size = 0x8000, scoped, tag = 'input window, operand 2, single buffered']
    #allocation9 [shape = 'u8[65536]{0}', space=vmem, size = 0x10000, scoped, tag = 'input window, operand 3, single buffered']
    #allocation10 [shape = 's32[1]{0}', space=sflag, size = 0x4, scoped, tag = 'scoped memory for tpu_custom_call.1']
    #allocation11 [shape = 'u8[65536]{0}', space=vmem, size = 0x10000, scoped, tag = 'input window, operand 4, single buffered']
    #allocation12 [shape = 'u8[196608]{0}', space=vmem, size = 0x30000, scoped, tag = 'input window, operand 7, single buffered']
    #allocation13 [shape = 's32[1]{0}', space=sflag, size = 0x4, scoped, tag = 'scoped memory for tpu_custom_call.1']
    #allocation14 [shape = 'u8[196608]{0}', space=vmem, size = 0x30000, scoped, tag = 'input window, operand 8, single buffered']
    #allocation15 [shape = 'u8[196608]{0}', space=vmem, size = 0x30000, scoped, tag = 'input window, operand 9, single buffered']
    #allocation16 [shape = 's32[1]{0}', space=sflag, size = 0x4, scoped, tag = 'scoped memory for tpu_custom_call.1']
    #allocation17 [shape = 'u8[65536]{0}', space=vmem, size = 0x10000, scoped, tag = 'input window, operand 12, single buffered']
    #allocation18 [shape = 'u8[4096]{0}', space=vmem, size = 0x1000, scoped, tag = 'output window, operand 0, single buffered']
    #allocation19 [shape = 'u8[4096]{0}', space=vmem, size = 0x1000, scoped, tag = 'output window, operand 1, single buffered']
    #allocation20 [shape = 's32[1]{0}', space=sflag, size = 0x4, scoped, tag = 'scoped memory for tpu_custom_call.1']
    %21 = vsyncpa [#allocation4], 0
    %22 = vsyncpa [#allocation7], 0
    %23 = vsyncpa [#allocation10], 0
    %24 = vsyncpa [#allocation13], 0
    %25 = vsyncpa [#allocation16], 0
    %26 = vsyncpa [#allocation5], 0
    %27 = vsyncpa [#allocation20], 0
    // Predicated region
    $region2: #{tpu_custom_call.1} parent=1 // pred_check
      _
    $region3: #{tpu_custom_call.1} parent=1 // pred_check_branch
      %29 = sbr.rel (0) target = $region5
    $region4: #{tpu_custom_call.1} parent=1 // pred_region
      %s31 = ssub.s32 128, 128
      %32 = vsyncadd [#allocation4], %s31
      %s34 = sshll.u32 [#allocation3], 4
      %s35 = int_to_ptr.vmem [resolvable:$true] %s34
      %37 = dma.hbm_to_vmem [thread:$0]  %s0, 128, %s35, [#allocation4]
    $region5: #{tpu_custom_call.1} parent=1 // pred_fallthru
      _
    // Predicated region
    $region6: #{tpu_custom_call.1} parent=1 // pred_check
      _
    $region7: #{tpu_custom_call.1} parent=1 // pred_check_branch
      %39 = sbr.rel (0) target = $region9
    $region8: #{tpu_custom_call.1} parent=1 // pred_region
      %s41 = ssub.s32 128, 128
      %42 = vsyncadd [#allocation7], %s41
      %s44 = sshll.u32 [#allocation6], 4
      %s45 = int_to_ptr.vmem [resolvable:$true] %s44
      %47 = dma.hbm_to_vmem [thread:$0]  %s1, 128, %s45, [#allocation7]
    $region9: #{tpu_custom_call.1} parent=1 // pred_fallthru
      _
    // Predicated region
    $region10: #{tpu_custom_call.1} parent=1 // pred_check
      _
    $region11: #{tpu_custom_call.1} parent=1 // pred_check_branch
      %49 = sbr.rel (0) target = $region13
    $region12: #{tpu_custom_call.1} parent=1 // pred_region
      %s51 = ssub.s32 1024, 1024
      %52 = vsyncadd [#allocation7], %s51
      %s53 = sshll.u32 [#allocation8], 4
      %s54 = int_to_ptr.vmem [resolvable:$true] %s53
      %59 = dma.hbm_to_vmem [thread:$0]  %s2, 1024, %s54, [#allocation7], 128, 128, 8
    $region13: #{tpu_custom_call.1} parent=1 // pred_fallthru
      _
    // Predicated region
    $region14: #{tpu_custom_call.1} parent=1 // pred_check
      _
    $region15: #{tpu_custom_call.1} parent=1 // pred_check_branch
      %61 = sbr.rel (0) target = $region17
    $region16: #{tpu_custom_call.1} parent=1 // pred_region
      %s63 = ssub.s32 2048, 2048
      %64 = vsyncadd [#allocation10], %s63
      %s65 = sshll.u32 [#allocation9], 4
      %s66 = int_to_ptr.vmem [resolvable:$true] %s65
      %71 = dma.hbm_to_vmem [thread:$0]  %s3, 2048, %s66, [#allocation10], 128, 128, 8
    $region17: #{tpu_custom_call.1} parent=1 // pred_fallthru
      _
    // Predicated region
    $region18: #{tpu_custom_call.1} parent=1 // pred_check
      _
    $region19: #{tpu_custom_call.1} parent=1 // pred_check_branch
      %73 = sbr.rel (0) target = $region21
    $region20: #{tpu_custom_call.1} parent=1 // pred_region
      %s75 = ssub.s32 2048, 2048
      %76 = vsyncadd [#allocation10], %s75
      %s77 = sshll.u32 [#allocation11], 4
      %s78 = int_to_ptr.vmem [resolvable:$true] %s77
      %83 = dma.hbm_to_vmem [thread:$0]  %s4, 2048, %s78, [#allocation10], 128, 128, 8
    $region21: #{tpu_custom_call.1} parent=1 // pred_fallthru
      _
    // Predicated region
    $region22: #{tpu_custom_call.1} parent=1 // pred_check
      _
    $region23: #{tpu_custom_call.1} parent=1 // pred_check_branch
      %85 = sbr.rel (0) target = $region25
    $region24: #{tpu_custom_call.1} parent=1 // pred_region
      _
    $region25: #{tpu_custom_call.1} parent=1 // pred_fallthru
      _
    // Predicated region
    $region26: #{tpu_custom_call.1} parent=1 // pred_check
      _
    $region27: #{tpu_custom_call.1} parent=1 // pred_check_branch
      %87 = sbr.rel (0) target = $region29
    $region28: #{tpu_custom_call.1} parent=1 // pred_region
      _
    $region29: #{tpu_custom_call.1} parent=1 // pred_fallthru
      _
    // Predicated region
    $region30: #{tpu_custom_call.1} parent=1 // pred_check
      _
    $region31: #{tpu_custom_call.1} parent=1 // pred_check_branch
      %89 = sbr.rel (0) target = $region33
    $region32: #{tpu_custom_call.1} parent=1 // pred_region
      %s91 = ssub.s32 6144, 6144
      %92 = vsyncadd [#allocation13], %s91
      %s93 = sshll.u32 [#allocation12], 4
      %s94 = int_to_ptr.vmem [resolvable:$true] %s93
      %99 = dma.hbm_to_vmem [thread:$0]  %s7, 6144, %s94, [#allocation13], 384, 384, 24
    $region33: #{tpu_custom_call.1} parent=1 // pred_fallthru
      _
    // Predicated region
    $region34: #{tpu_custom_call.1} parent=1 // pred_check
      _
    $region35: #{tpu_custom_call.1} parent=1 // pred_check_branch
      %101 = sbr.rel (0) target = $region37
    $region36: #{tpu_custom_call.1} parent=1 // pred_region
      %s103 = ssub.s32 6144, 6144
      %104 = vsyncadd [#allocation13], %s103
      %s105 = sshll.u32 [#allocation14], 4
      %s106 = int_to_ptr.vmem [resolvable:$true] %s105
      %111 = dma.hbm_to_vmem [thread:$0]  %s8, 6144, %s106, [#allocation13], 384, 384, 24
    $region37: #{tpu_custom_call.1} parent=1 // pred_fallthru
      _
    // Predicated region
    $region38: #{tpu_custom_call.1} parent=1 // pred_check
      _
    $region39: #{tpu_custom_call.1} parent=1 // pred_check_branch
      %113 = sbr.rel (0) target = $region41
    $region40: #{tpu_custom_call.1} parent=1 // pred_region
      %s115 = ssub.s32 6144, 6144
      %116 = vsyncadd [#allocation16], %s115
      %s117 = sshll.u32 [#allocation15], 4
      %s118 = int_to_ptr.vmem [resolvable:$true] %s117
      %123 = dma.hbm_to_vmem [thread:$0]  %s9, 6144, %s118, [#allocation16], 384, 384, 24
    $region41: #{tpu_custom_call.1} parent=1 // pred_fallthru
      _
    // Predicated region
    $region42: #{tpu_custom_call.1} parent=1 // pred_check
      _
    $region43: #{tpu_custom_call.1} parent=1 // pred_check_branch
      %125 = sbr.rel (0) target = $region45
    $region44: #{tpu_custom_call.1} parent=1 // pred_region
      _
    $region45: #{tpu_custom_call.1} parent=1 // pred_fallthru
      _
    // Predicated region
    $region46: #{tpu_custom_call.1} parent=1 // pred_check
      _
    $region47: #{tpu_custom_call.1} parent=1 // pred_check_branch
      %127 = sbr.rel (0) target = $region49
    $region48: #{tpu_custom_call.1} parent=1 // pred_region
      _
    $region49: #{tpu_custom_call.1} parent=1 // pred_fallthru
      _
    // Predicated region
    $region50: #{tpu_custom_call.1} parent=1 // pred_check
      _
    $region51: #{tpu_custom_call.1} parent=1 // pred_check_branch
      %129 = sbr.rel (0) target = $region53
    $region52: #{tpu_custom_call.1} parent=1 // pred_region
      %s131 = ssub.s32 2048, 2048
      %132 = vsyncadd [#allocation16], %s131
      %s133 = sshll.u32 [#allocation17], 4
      %s134 = int_to_ptr.vmem [resolvable:$true] %s133
      %139 = dma.hbm_to_vmem [thread:$0]  %s12, 2048, %s134, [#allocation16], 128, 128, 8
    $region53: #{tpu_custom_call.1} parent=1 // pred_fallthru
      _
    // Predicated region
    $region54: #{tpu_custom_call.1} parent=1 // pred_check
      _
    $region55: #{tpu_custom_call.1} parent=1 // pred_check_branch
      %141 = sbr.rel (0) target = $region57
    $region56: #{tpu_custom_call.1} parent=1 // pred_region
      _
    $region57: #{tpu_custom_call.1} parent=1 // pred_fallthru
      _
    // Predicated region
    $region58: #{tpu_custom_call.1} parent=1 // pred_check
      _
    $region59: #{tpu_custom_call.1} parent=1 // pred_check_branch
      %143 = sbr.rel (0) target = $region61
    $region60: #{tpu_custom_call.1} parent=1 // pred_region
      %144 = dma.done [#allocation4], 128
    $region61: #{tpu_custom_call.1} parent=1 // pred_fallthru
      _
    // Predicated region
    $region62: #{tpu_custom_call.1} parent=1 // pred_check
      _
    $region63: #{tpu_custom_call.1} parent=1 // pred_check_branch
      %146 = sbr.rel (0) target = $region65
    $region64: #{tpu_custom_call.1} parent=1 // pred_region
      %147 = dma.done [#allocation7], 128
    $region65: #{tpu_custom_call.1} parent=1 // pred_fallthru
      _
    // Predicated region
    $region66: #{tpu_custom_call.1} parent=1 // pred_check
      _
    $region67: #{tpu_custom_call.1} parent=1 // pred_check_branch
      %149 = sbr.rel (0) target = $region69
    $region68: #{tpu_custom_call.1} parent=1 // pred_region
      %150 = dma.done [#allocation7], 1024
    $region69: #{tpu_custom_call.1} parent=1 // pred_fallthru
      _
    // Predicated region
    $region70: #{tpu_custom_call.1} parent=1 // pred_check
      _
    $region71: #{tpu_custom_call.1} parent=1 // pred_check_branch
      %152 = sbr.rel (0) target = $region73
    $region72: #{tpu_custom_call.1} parent=1 // pred_region
      %153 = dma.done [#allocation10], 2048
    $region73: #{tpu_custom_call.1} parent=1 // pred_fallthru
      _
    // Predicated region
    $region74: #{tpu_custom_call.1} parent=1 // pred_check
      _
    $region75: #{tpu_custom_call.1} parent=1 // pred_check_branch
      %155 = sbr.rel (0) target = $region77
    $region76: #{tpu_custom_call.1} parent=1 // pred_region
      %156 = dma.done [#allocation10], 2048
    $region77: #{tpu_custom_call.1} parent=1 // pred_fallthru
      _
    // Predicated region
    $region78: #{tpu_custom_call.1} parent=1 // pred_check
      _
    $region79: #{tpu_custom_call.1} parent=1 // pred_check_branch
      %158 = sbr.rel (0) target = $region81
    $region80: #{tpu_custom_call.1} parent=1 // pred_region
      %159 = dma.done [#allocation13], 6144
    $region81: #{tpu_custom_call.1} parent=1 // pred_fallthru
      _
    // Predicated region
    $region82: #{tpu_custom_call.1} parent=1 // pred_check
      _
    $region83: #{tpu_custom_call.1} parent=1 // pred_check_branch
      %161 = sbr.rel (0) target = $region85
    $region84: #{tpu_custom_call.1} parent=1 // pred_region
      %162 = dma.done [#allocation13], 6144
    $region85: #{tpu_custom_call.1} parent=1 // pred_fallthru
      _
    // Predicated region
    $region86: #{tpu_custom_call.1} parent=1 // pred_check
      _
    $region87: #{tpu_custom_call.1} parent=1 // pred_check_branch
      %164 = sbr.rel (0) target = $region89
    $region88: #{tpu_custom_call.1} parent=1 // pred_region
      %165 = dma.done [#allocation16], 6144
    $region89: #{tpu_custom_call.1} parent=1 // pred_fallthru
      _
    // Predicated region
    $region90: #{tpu_custom_call.1} parent=1 // pred_check
      _
    $region91: #{tpu_custom_call.1} parent=1 // pred_check_branch
      %167 = sbr.rel (0) target = $region93
    $region92: #{tpu_custom_call.1} parent=1 // pred_region
      %168 = dma.done [#allocation16], 2048
    $region93: #{tpu_custom_call.1} parent=1 // pred_fallthru
      _
    %p169 = scmp.eq.s32.totalorder 0, 0
    // Predicated region
    $region94: #{tpu_custom_call.1} parent=1 // pred_check
      %p170 = pneg %p169
    $region95: #{tpu_custom_call.1} parent=1 // pred_check_branch
      %172 = sbr.rel (%p170) target = $region97
    $region96: #{tpu_custom_call.1} parent=1 // pred_region
      %v173 = vld [vmem:[#allocation6] sm:$0xff]
      %v174 = vld [vmem:[#allocation3] sm:$0xff]
      %v175 = vld [vmem:[#allocation8] sm:$0xff]
      %v176 = vld [vmem:[#allocation8 + $0x8] sm:$0xff]
      %v177 = vld [vmem:[#allocation8 + $0x10] sm:$0xff]
      %v178 = vld [vmem:[#allocation8 + $0x18] sm:$0xff]
      %v179 = vld [vmem:[#allocation8 + $0x20] sm:$0xff]
      %v180 = vld [vmem:[#allocation8 + $0x28] sm:$0xff]
      %v181 = vld [vmem:[#allocation8 + $0x30] sm:$0xff]
      %v182 = vld [vmem:[#allocation8 + $0x38] sm:$0xff]
      %v183 = vld [vmem:[#allocation11] sm:$0xff]
      %v184 = vld [vmem:[#allocation11 + $0x8] sm:$0xff]
      %v185 = vld [vmem:[#allocation11 + $0x10] sm:$0xff]
      %v186 = vld [vmem:[#allocation11 + $0x18] sm:$0xff]
      %v187 = vld [vmem:[#allocation11 + $0x20] sm:$0xff]
      %v188 = vld [vmem:[#allocation11 + $0x28] sm:$0xff]
      %v189 = vld [vmem:[#allocation11 + $0x30] sm:$0xff]
      %v190 = vld [vmem:[#allocation11 + $0x38] sm:$0xff]
      %v191 = vld [vmem:[#allocation11 + $0x40] sm:$0xff]
      %v192 = vld [vmem:[#allocation11 + $0x48] sm:$0xff]
      %v193 = vld [vmem:[#allocation11 + $0x50] sm:$0xff]
      %v194 = vld [vmem:[#allocation11 + $0x58] sm:$0xff]
      %v195 = vld [vmem:[#allocation11 + $0x60] sm:$0xff]
      %v196 = vld [vmem:[#allocation11 + $0x68] sm:$0xff]
      %v197 = vld [vmem:[#allocation11 + $0x70] sm:$0xff]
      %v198 = vld [vmem:[#allocation11 + $0x78] sm:$0xff]
      %199 = vmatprep.subr.mxu0 0.0
      %200 = vmatpush1.msra.mxu0 %v198
      %201 = vmatprep.subr.mxu0 0.0
      %202 = vmatpush1.msra.mxu0 %v197
      %203 = vmatprep.subr.mxu0 0.0
      %204 = vmatpush1.msra.mxu0 %v196
      %205 = vmatprep.subr.mxu0 0.0
      %206 = vmatpush1.msra.mxu0 %v195
      %207 = vmatprep.subr.mxu0 0.0
      %208 = vmatpush1.msra.mxu0 %v194
      %209 = vmatprep.subr.mxu0 0.0
      %210 = vmatpush1.msra.mxu0 %v193
      %211 = vmatprep.subr.mxu0 0.0
      %212 = vmatpush1.msra.mxu0 %v192
      %213 = vmatprep.subr.mxu0 0.0
      %214 = vmatpush1.msra.mxu0 %v191
      %215 = vmatprep.subr.mxu0 0.0
      %216 = vmatpush1.msra.mxu0 %v190
      %217 = vmatprep.subr.mxu0 0.0
      %218 = vmatpush1.msra.mxu0 %v189
      %219 = vmatprep.subr.mxu0 0.0
      %220 = vmatpush1.msra.mxu0 %v188
      %221 = vmatprep.subr.mxu0 0.0
      %222 = vmatpush1.msra.mxu0 %v187
      %223 = vmatprep.subr.mxu0 0.0
      %224 = vmatpush1.msra.mxu0 %v186
      %225 = vmatprep.subr.mxu0 0.0
      %226 = vmatpush1.msra.mxu0 %v185
      %227 = vmatprep.subr.mxu0 0.0
      %228 = vmatpush1.msra.mxu0 %v184
      %229 = vmatprep.subr.mxu0 0.0
      %230 = vmatpush1.msra.mxu0 %v183
      %231 = vmatprep.subr.mxu0 0.0
      %232 = vmatpush2.msra.mxu0 0.0
      %233 = vmatprep.subr.mxu0 0.0
      %234 = vmatpush2.msra.mxu0 0.0
      %235 = vmatprep.subr.mxu0 0.0
      %236 = vmatpush2.msra.mxu0 0.0
      %237 = vmatprep.subr.mxu0 0.0
      %238 = vmatpush2.msra.mxu0 0.0
      %239 = vmatprep.subr.mxu0 0.0
      %240 = vmatpush2.msra.mxu0 0.0
      %241 = vmatprep.subr.mxu0 0.0
      %242 = vmatpush2.msra.mxu0 0.0
      %243 = vmatprep.subr.mxu0 0.0
      %244 = vmatpush2.msra.mxu0 0.0
      %245 = vmatprep.subr.mxu0 0.0
      %246 = vmatpush2.msra.mxu0 0.0
      %247 = vmatprep.subr.mxu0 0.0
      %248 = vmatpush2.msra.mxu0 0.0
      %249 = vmatprep.subr.mxu0 0.0
      %250 = vmatpush2.msra.mxu0 0.0
      %251 = vmatprep.subr.mxu0 0.0
      %252 = vmatpush2.msra.mxu0 0.0
      %253 = vmatprep.subr.mxu0 0.0
      %254 = vmatpush2.msra.mxu0 0.0
      %255 = vmatprep.subr.mxu0 0.0
      %256 = vmatpush2.msra.mxu0 0.0
      %257 = vmatprep.subr.mxu0 0.0
      %258 = vmatpush2.msra.mxu0 0.0
      %259 = vmatprep.subr.mxu0 0.0
      %260 = vmatpush2.msra.mxu0 0.0
      %261 = vmatprep.subr.mxu0 0.0
      %262 = vmatpush2.msra.mxu0 0.0
      %263 = vmatprep.mubr.f32.mxu0 0.0
      %264 = vmatmul.mubr.f32.gmra.mxu0 %v175
      %v265 = vpop.f32.mrf.mxu0
      %v266 = vadd.f32 0.0, %v265
      %v267 = vpop.f32.mrf.mxu0
      %268 = vmatprep.mubr.f32.mxu0 0.0
      %269 = vmatmul.mubr.f32.gmra.mxu0 %v176
      %v270 = vpop.f32.mrf.mxu0
      %v271 = vadd.f32 0.0, %v270
      %v272 = vpop.f32.mrf.mxu0
      %273 = vmatprep.mubr.f32.mxu0 0.0
      %274 = vmatmul.mubr.f32.gmra.mxu0 %v177
      %v275 = vpop.f32.mrf.mxu0
      %v276 = vadd.f32 0.0, %v275
      %v277 = vpop.f32.mrf.mxu0
      %278 = vmatprep.mubr.f32.mxu0 0.0
      %279 = vmatmul.mubr.f32.gmra.mxu0 %v178
      %v280 = vpop.f32.mrf.mxu0
      %v281 = vadd.f32 0.0, %v280
      %v282 = vpop.f32.mrf.mxu0
      %283 = vmatprep.mubr.f32.mxu0 0.0
      %284 = vmatmul.mubr.f32.gmra.mxu0 %v179
      %v285 = vpop.f32.mrf.mxu0
      %v286 = vadd.f32 0.0, %v285
      %v287 = vpop.f32.mrf.mxu0
      %288 = vmatprep.mubr.f32.mxu0 0.0
      %289 = vmatmul.mubr.f32.gmra.mxu0 %v180
      %v290 = vpop.f32.mrf.mxu0
      %v291 = vadd.f32 0.0, %v290
      %v292 = vpop.f32.mrf.mxu0
      %293 = vmatprep.mubr.f32.mxu0 0.0
      %294 = vmatmul.mubr.f32.gmra.mxu0 %v181
      %v295 = vpop.f32.mrf.mxu0
      %v296 = vadd.f32 0.0, %v295
      %v297 = vpop.f32.mrf.mxu0
      %298 = vmatprep.mubr.f32.mxu0 0.0
      %299 = vmatmul.mubr.f32.gmra.mxu0 %v182
      %v300 = vpop.f32.mrf.mxu0
      %v301 = vadd.f32 0.0, %v300
      %v302 = vpop.f32.mrf.mxu0
      %303 = vdwg.mxu0
      %v304 = vld [vmem:[#allocation9] sm:$0xff]
      %v305 = vld [vmem:[#allocation9 + $0x8] sm:$0xff]
      %v306 = vld [vmem:[#allocation9 + $0x10] sm:$0xff]
      %v307 = vld [vmem:[#allocation9 + $0x18] sm:$0xff]
      %v308 = vld [vmem:[#allocation9 + $0x20] sm:$0xff]
      %v309 = vld [vmem:[#allocation9 + $0x28] sm:$0xff]
      %v310 = vld [vmem:[#allocation9 + $0x30] sm:$0xff]
      %v311 = vld [vmem:[#allocation9 + $0x38] sm:$0xff]
      %v312 = vld [vmem:[#allocation9 + $0x40] sm:$0xff]
      %v313 = vld [vmem:[#allocation9 + $0x48] sm:$0xff]
      %v314 = vld [vmem:[#allocation9 + $0x50] sm:$0xff]
      %v315 = vld [vmem:[#allocation9 + $0x58] sm:$0xff]
      %v316 = vld [vmem:[#allocation9 + $0x60] sm:$0xff]
      %v317 = vld [vmem:[#allocation9 + $0x68] sm:$0xff]
      %v318 = vld [vmem:[#allocation9 + $0x70] sm:$0xff]
      %v319 = vld [vmem:[#allocation9 + $0x78] sm:$0xff]
      %320 = vmatprep.subr.mxu0 0.0
      %321 = vmatpush1.msra.mxu0 %v319
      %322 = vmatprep.subr.mxu0 0.0
      %323 = vmatpush1.msra.mxu0 %v318
      %324 = vmatprep.subr.mxu0 0.0
      %325 = vmatpush1.msra.mxu0 %v317
      %326 = vmatprep.subr.mxu0 0.0
      %327 = vmatpush1.msra.mxu0 %v316
      %328 = vmatprep.subr.mxu0 0.0
      %329 = vmatpush1.msra.mxu0 %v315
      %330 = vmatprep.subr.mxu0 0.0
      %331 = vmatpush1.msra.mxu0 %v314
      %332 = vmatprep.subr.mxu0 0.0
      %333 = vmatpush1.msra.mxu0 %v313
      %334 = vmatprep.subr.mxu0 0.0
      %335 = vmatpush1.msra.mxu0 %v312
      %336 = vmatprep.subr.mxu0 0.0
      %337 = vmatpush1.msra.mxu0 %v311
      %338 = vmatprep.subr.mxu0 0.0
      %339 = vmatpush1.msra.mxu0 %v310
      %340 = vmatprep.subr.mxu0 0.0
      %341 = vmatpush1.msra.mxu0 %v309
      %342 = vmatprep.subr.mxu0 0.0
      %343 = vmatpush1.msra.mxu0 %v308
      %344 = vmatprep.subr.mxu0 0.0
      %345 = vmatpush1.msra.mxu0 %v307
      %346 = vmatprep.subr.mxu0 0.0
      %347 = vmatpush1.msra.mxu0 %v306
      %348 = vmatprep.subr.mxu0 0.0
      %349 = vmatpush1.msra.mxu0 %v305
      %350 = vmatprep.subr.mxu0 0.0
      %351 = vmatpush1.msra.mxu0 %v304
      %352 = vmatprep.subr.mxu0 0.0
      %353 = vmatpush2.msra.mxu0 0.0
      %354 = vmatprep.subr.mxu0 0.0
      %355 = vmatpush2.msra.mxu0 0.0
      %356 = vmatprep.subr.mxu0 0.0
      %357 = vmatpush2.msra.mxu0 0.0
      %358 = vmatprep.subr.mxu0 0.0
      %359 = vmatpush2.msra.mxu0 0.0
      %360 = vmatprep.subr.mxu0 0.0
      %361 = vmatpush2.msra.mxu0 0.0
      %362 = vmatprep.subr.mxu0 0.0
      %363 = vmatpush2.msra.mxu0 0.0
      %364 = vmatprep.subr.mxu0 0.0
      %365 = vmatpush2.msra.mxu0 0.0
      %366 = vmatprep.subr.mxu0 0.0
      %367 = vmatpush2.msra.mxu0 0.0
      %368 = vmatprep.subr.mxu0 0.0
      %369 = vmatpush2.msra.mxu0 0.0
      %370 = vmatprep.subr.mxu0 0.0
      %371 = vmatpush2.msra.mxu0 0.0
      %372 = vmatprep.subr.mxu0 0.0
      %373 = vmatpush2.msra.mxu0 0.0
      %374 = vmatprep.subr.mxu0 0.0
      %375 = vmatpush2.msra.mxu0 0.0
      %376 = vmatprep.subr.mxu0 0.0
      %377 = vmatpush2.msra.mxu0 0.0
      %378 = vmatprep.subr.mxu0 0.0
      %379 = vmatpush2.msra.mxu0 0.0
      %380 = vmatprep.subr.mxu0 0.0
      %381 = vmatpush2.msra.mxu0 0.0
      %382 = vmatprep.subr.mxu0 0.0
      %383 = vmatpush2.msra.mxu0 0.0
      %384 = vmatprep.mubr.f32.mxu0 0.0
      %385 = vmatmul.mubr.f32.gmra.mxu0 %v173
      %v386 = vpop.f32.mrf.mxu0
      %v387 = vadd.f32 0.0, %v386
      %v388 = vpop.f32.mrf.mxu0
      %389 = vdwg.mxu0
      %v391 = vcombine.high %v387, %v387
      %v393 = vunpack.c.l.s4 1966171168
      %v394 = vunpack.c.0.s8 %v393
      %v395 = vlaneseq
      %v396 = vshrl.u32 %v395, 7
      %v397 = vsub.s32 %v394, %v396
      %v398 = vrot.slane %v387, %v397
      %v400 = vunpack.c.l.s4 1966171168
      %v401 = vunpack.c.0.s8 %v400
      %v402 = vlaneseq
      %v403 = vshrl.u32 %v402, 7
      %v404 = vsub.s32 %v401, %v403
      %v405 = vrot.slane %v391, %v404
      %v406 = vcombine.high %v398, %v398
      %v407 = vcombine.high %v405, %v405
      %v409 = vunpack.c.l.s4 1966171168
      %v410 = vunpack.c.0.s8 %v409
      %v411 = vlaneseq
      %v412 = vshrl.u32 %v411, 7
      %v413 = vsub.s32 %v410, %v412
      %v414 = vrot.slane %v398, %v413
      %v416 = vunpack.c.l.s4 1966171168
      %v417 = vunpack.c.0.s8 %v416
      %v418 = vlaneseq
      %v419 = vshrl.u32 %v418, 7
      %v420 = vsub.s32 %v417, %v419
      %v421 = vrot.slane %v405, %v420
      %v423 = vunpack.c.l.s4 1966171168
      %v424 = vunpack.c.0.s8 %v423
      %v425 = vlaneseq
      %v426 = vshrl.u32 %v425, 7
      %v427 = vsub.s32 %v424, %v426
      %v428 = vrot.slane %v406, %v427
      %v430 = vunpack.c.l.s4 1966171168
      %v431 = vunpack.c.0.s8 %v430
      %v432 = vlaneseq
      %v433 = vshrl.u32 %v432, 7
      %v434 = vsub.s32 %v431, %v433
      %v435 = vrot.slane %v407, %v434
      %v436 = vcombine.high %v414, %v414
      %v437 = vcombine.high %v421, %v421
      %v438 = vcombine.high %v428, %v428
      %v439 = vcombine.high %v435, %v435
      %v440 = vlaneseq
      %v441 = vshrl.u32 %v440, 7
      %v442 = vsub.s32 0, %v441
      %v443 = vrot.slane %v414, %v442
      %v444 = vlaneseq
      %v445 = vshrl.u32 %v444, 7
      %v446 = vsub.s32 0, %v445
      %v447 = vrot.slane %v428, %v446
      %v448 = vlaneseq
      %v449 = vshrl.u32 %v448, 7
      %v450 = vsub.s32 0, %v449
      %v451 = vrot.slane %v436, %v450
      %v452 = vlaneseq
      %v453 = vshrl.u32 %v452, 7
      %v454 = vsub.s32 0, %v453
      %v455 = vrot.slane %v438, %v454
      %v456 = vlaneseq
      %v457 = vshrl.u32 %v456, 7
      %v458 = vsub.s32 0, %v457
      %v459 = vrot.slane %v421, %v458
      %v460 = vlaneseq
      %v461 = vshrl.u32 %v460, 7
      %v462 = vsub.s32 0, %v461
      %v463 = vrot.slane %v435, %v462
      %v464 = vlaneseq
      %v465 = vshrl.u32 %v464, 7
      %v466 = vsub.s32 0, %v465
      %v467 = vrot.slane %v437, %v466
      %v468 = vlaneseq
      %v469 = vshrl.u32 %v468, 7
      %v470 = vsub.s32 0, %v469
      %v471 = vrot.slane %v439, %v470
      %v480 = vadd.f32 %v266, %v443
      %v481 = vadd.f32 %v271, %v447
      %v482 = vadd.f32 %v276, %v451
      %v483 = vadd.f32 %v281, %v455
      %v484 = vadd.f32 %v286, %v459
      %v485 = vadd.f32 %v291, %v463
      %v486 = vadd.f32 %v296, %v467
      %v487 = vadd.f32 %v301, %v471
      %v488 = vld [vmem:[%s5] sm:$0x1]
      %v490 = vlaneseq
      %v491 = vshrl.u32 %v490, 7
      %v492 = vsub.s32 0, %v491
      %v493 = vrot.slane %v488, %v492
      %v495 = vadd.f32 %v480, %v493
      %v496 = vadd.f32 %v481, %v493
      %v497 = vadd.f32 %v482, %v493
      %v498 = vadd.f32 %v483, %v493
      %v499 = vadd.f32 %v484, %v493
      %v500 = vadd.f32 %v485, %v493
      %v501 = vadd.f32 %v486, %v493
      %v502 = vadd.f32 %v487, %v493
      %v503 = vtanh.pop %v495
      %v504 = vtanh.pop %v496
      %v505 = vtanh.pop %v497
      %v506 = vtanh.pop %v498
      %v507 = vtanh.pop %v499
      %v508 = vtanh.pop %v500
      %v509 = vtanh.pop %v501
      %v510 = vtanh.pop %v502
      %v511 = vld [vmem:[%s6] sm:$0x1]
      %v513 = vlaneseq
      %v514 = vshrl.u32 %v513, 7
      %v515 = vsub.s32 0, %v514
      %v516 = vrot.slane %v511, %v515
      %v518 = vmul.f32 %v503, %v516
      %v519 = vmul.f32 %v504, %v516
      %v520 = vmul.f32 %v505, %v516
      %v521 = vmul.f32 %v506, %v516
      %v522 = vmul.f32 %v507, %v516
      %v523 = vmul.f32 %v508, %v516
      %v524 = vmul.f32 %v509, %v516
      %v525 = vmul.f32 %v510, %v516
      %526 = vadd.xlane.f32.xlu0 %v518
      %v527 = vpop.xlane.xlu0 %526
      %528 = vadd.xlane.f32.xlu0 %v519
      %v529 = vpop.xlane.xlu0 %528
      %530 = vadd.xlane.f32.xlu0 %v520
      %v531 = vpop.xlane.xlu0 %530
      %532 = vadd.xlane.f32.xlu0 %v521
      %v533 = vpop.xlane.xlu0 %532
      %534 = vadd.xlane.f32.xlu0 %v522
      %v535 = vpop.xlane.xlu0 %534
      %536 = vadd.xlane.f32.xlu0 %v523
      %v537 = vpop.xlane.xlu0 %536
      %538 = vadd.xlane.f32.xlu0 %v524
      %v539 = vpop.xlane.xlu0 %538
      %540 = vadd.xlane.f32.xlu0 %v525
      %v541 = vpop.xlane.xlu0 %540
      %v550 = vlaneseq
      %v551 = vand.u32 %v550, 127
      %v552 = vlaneseq
      %v553 = vshrl.u32 %v552, 7
      %v554 = vsub.s32 %v551, %v553
      %v555 = vrot.slane %v527, %v554
      %v556 = vlaneseq
      %v557 = vshrl.u32 %v556, 7
      %v558 = vsub.s32 %v551, %v557
      %v559 = vrot.slane %v529, %v558
      %v560 = vlaneseq
      %v561 = vshrl.u32 %v560, 7
      %v562 = vsub.s32 %v551, %v561
      %v563 = vrot.slane %v531, %v562
      %v564 = vlaneseq
      %v565 = vshrl.u32 %v564, 7
      %v566 = vsub.s32 %v551, %v565
      %v567 = vrot.slane %v533, %v566
      %v568 = vlaneseq
      %v569 = vshrl.u32 %v568, 7
      %v570 = vsub.s32 %v551, %v569
      %v571 = vrot.slane %v535, %v570
      %v572 = vlaneseq
      %v573 = vshrl.u32 %v572, 7
      %v574 = vsub.s32 %v551, %v573
      %v575 = vrot.slane %v537, %v574
      %v576 = vlaneseq
      %v577 = vshrl.u32 %v576, 7
      %v578 = vsub.s32 %v551, %v577
      %v579 = vrot.slane %v539, %v578
      %v580 = vlaneseq
      %v581 = vshrl.u32 %v580, 7
      %v582 = vsub.s32 %v551, %v581
      %v583 = vrot.slane %v541, %v582
      %vm584 = vcmask 1041409
      %v585 = vsel %vm584, %v559, %v555
      %vm586 = vcmask 1042434
      %v587 = vsel %vm586, %v563, %v585
      %vm588 = vcmask 1043459
      %v589 = vsel %vm588, %v567, %v587
      %vm590 = vcmask 1044484
      %v591 = vsel %vm590, %v571, %v589
      %vm592 = vcmask 1045509
      %v593 = vsel %vm592, %v575, %v591
      %vm594 = vcmask 1046534
      %v595 = vsel %vm594, %v579, %v593
      %vm596 = vcmask 1047559
      %v597 = vsel %vm596, %v583, %v595
      %vm599 = vcmask 64512
      %v600 = vsel %vm599, %v597, -inf
      %601 = vmax.xlane.f32.xlu0 %v600
      %v602 = vpop.xlane.xlu0 %601
      %v604 = vlaneseq
      %v605 = vshrl.u32 %v604, 7
      %v606 = vsub.s32 0, %v605
      %v607 = vrot.slane %v602, %v606
      %v608 = vlaneseq
      %v609 = vshrl.u32 %v608, 7
      %v610 = vsub.s32 1, %v609
      %v611 = vrot.slane %v602, %v610
      %v612 = vlaneseq
      %v613 = vshrl.u32 %v612, 7
      %v614 = vsub.s32 2, %v613
      %v615 = vrot.slane %v602, %v614
      %v616 = vlaneseq
      %v617 = vshrl.u32 %v616, 7
      %v618 = vsub.s32 3, %v617
      %v619 = vrot.slane %v602, %v618
      %v620 = vlaneseq
      %v621 = vshrl.u32 %v620, 7
      %v622 = vsub.s32 4, %v621
      %v623 = vrot.slane %v602, %v622
      %v624 = vlaneseq
      %v625 = vshrl.u32 %v624, 7
      %v626 = vsub.s32 5, %v625
      %v627 = vrot.slane %v602, %v626
      %v628 = vlaneseq
      %v629 = vshrl.u32 %v628, 7
      %v630 = vsub.s32 6, %v629
      %v631 = vrot.slane %v602, %v630
      %v632 = vlaneseq
      %v633 = vshrl.u32 %v632, 7
      %v634 = vsub.s32 7, %v633
      %v635 = vrot.slane %v602, %v634
      %v644 = vsub.f32 %v527, %v607
      %v645 = vsub.f32 %v529, %v611
      %v646 = vsub.f32 %v531, %v615
      %v647 = vsub.f32 %v533, %v619
      %v648 = vsub.f32 %v535, %v623
      %v649 = vsub.f32 %v537, %v627
      %v650 = vsub.f32 %v539, %v631
      %v651 = vsub.f32 %v541, %v635
      %v652 = vmul.f32 %v644, 1.442695
      %v653 = vpow.pop %v652
      %v654 = vmul.f32 %v645, 1.442695
      %v655 = vpow.pop %v654
      %v656 = vmul.f32 %v646, 1.442695
      %v657 = vpow.pop %v656
      %v658 = vmul.f32 %v647, 1.442695
      %v659 = vpow.pop %v658
      %v660 = vmul.f32 %v648, 1.442695
      %v661 = vpow.pop %v660
      %v662 = vmul.f32 %v649, 1.442695
      %v663 = vpow.pop %v662
      %v664 = vmul.f32 %v650, 1.442695
      %v665 = vpow.pop %v664
      %v666 = vmul.f32 %v651, 1.442695
      %v667 = vpow.pop %v666
      %676 = vset.pattern.permute.xlu0 0
      %677 = vperm.xlu0 %676, %v653
      %v678 = vpop.permute.xlu0 %677
      %679 = vset.pattern.permute.xlu0 0
      %680 = vperm.xlu0 %679, %v655
      %v681 = vpop.permute.xlu0 %680
      %682 = vset.pattern.permute.xlu0 0
      %683 = vperm.xlu0 %682, %v657
      %v684 = vpop.permute.xlu0 %683
      %685 = vset.pattern.permute.xlu0 0
      %686 = vperm.xlu0 %685, %v659
      %v687 = vpop.permute.xlu0 %686
      %688 = vset.pattern.permute.xlu0 0
      %689 = vperm.xlu0 %688, %v661
      %v690 = vpop.permute.xlu0 %689
      %691 = vset.pattern.permute.xlu0 0
      %692 = vperm.xlu0 %691, %v663
      %v693 = vpop.permute.xlu0 %692
      %694 = vset.pattern.permute.xlu0 0
      %695 = vperm.xlu0 %694, %v665
      %v696 = vpop.permute.xlu0 %695
      %697 = vset.pattern.permute.xlu0 0
      %698 = vperm.xlu0 %697, %v667
      %v699 = vpop.permute.xlu0 %698
      %v700 = vlaneseq
      %v701 = vshrl.u32 %v700, 7
      %v702 = vsub.s32 %v551, %v701
      %v703 = vrot.slane %v678, %v702
      %v704 = vlaneseq
      %v705 = vshrl.u32 %v704, 7
      %v706 = vsub.s32 %v551, %v705
      %v707 = vrot.slane %v681, %v706
      %v708 = vlaneseq
      %v709 = vshrl.u32 %v708, 7
      %v710 = vsub.s32 %v551, %v709
      %v711 = vrot.slane %v684, %v710
      %v712 = vlaneseq
      %v713 = vshrl.u32 %v712, 7
      %v714 = vsub.s32 %v551, %v713
      %v715 = vrot.slane %v687, %v714
      %v716 = vlaneseq
      %v717 = vshrl.u32 %v716, 7
      %v718 = vsub.s32 %v551, %v717
      %v719 = vrot.slane %v690, %v718
      %v720 = vlaneseq
      %v721 = vshrl.u32 %v720, 7
      %v722 = vsub.s32 %v551, %v721
      %v723 = vrot.slane %v693, %v722
      %v724 = vlaneseq
      %v725 = vshrl.u32 %v724, 7
      %v726 = vsub.s32 %v551, %v725
      %v727 = vrot.slane %v696, %v726
      %v728 = vlaneseq
      %v729 = vshrl.u32 %v728, 7
      %v730 = vsub.s32 %v551, %v729
      %v731 = vrot.slane %v699, %v730
      %v732 = vsel %vm584, %v707, %v703
      %v733 = vsel %vm586, %v711, %v732
      %v734 = vsel %vm588, %v715, %v733
      %v735 = vsel %vm590, %v719, %v734
      %v736 = vsel %vm592, %v723, %v735
      %v737 = vsel %vm594, %v727, %v736
      %v738 = vsel %vm596, %v731, %v737
      %v740 = vsel %vm599, %v738, 0.0
      %741 = vadd.xlane.f32.xlu0 %v740
      %v742 = vpop.xlane.xlu0 %741
      %v743 = vrcp.pop %v742
      %v745 = vlaneseq
      %v746 = vshrl.u32 %v745, 7
      %v747 = vsub.s32 0, %v746
      %v748 = vrot.slane %v743, %v747
      %v749 = vlaneseq
      %v750 = vshrl.u32 %v749, 7
      %v751 = vsub.s32 1, %v750
      %v752 = vrot.slane %v743, %v751
      %v753 = vlaneseq
      %v754 = vshrl.u32 %v753, 7
      %v755 = vsub.s32 2, %v754
      %v756 = vrot.slane %v743, %v755
      %v757 = vlaneseq
      %v758 = vshrl.u32 %v757, 7
      %v759 = vsub.s32 3, %v758
      %v760 = vrot.slane %v743, %v759
      %v761 = vlaneseq
      %v762 = vshrl.u32 %v761, 7
      %v763 = vsub.s32 4, %v762
      %v764 = vrot.slane %v743, %v763
      %v765 = vlaneseq
      %v766 = vshrl.u32 %v765, 7
      %v767 = vsub.s32 5, %v766
      %v768 = vrot.slane %v743, %v767
      %v769 = vlaneseq
      %v770 = vshrl.u32 %v769, 7
      %v771 = vsub.s32 6, %v770
      %v772 = vrot.slane %v743, %v771
      %v773 = vlaneseq
      %v774 = vshrl.u32 %v773, 7
      %v775 = vsub.s32 7, %v774
      %v776 = vrot.slane %v743, %v775
      %v785 = vmul.f32 %v653, %v748
      %v786 = vmul.f32 %v655, %v752
      %v787 = vmul.f32 %v657, %v756
      %v788 = vmul.f32 %v659, %v760
      %v789 = vmul.f32 %v661, %v764
      %v790 = vmul.f32 %v663, %v768
      %v791 = vmul.f32 %v665, %v772
      %v792 = vmul.f32 %v667, %v776
      %794 = vset.pattern.permute.xlu0 0
      %795 = vperm.xlu0 %794, %v785
      %v796 = vpop.permute.xlu0 %795
      %799 = vset.pattern.permute.xlu0 0
      %800 = vperm.xlu0 %799, %v786
      %v801 = vpop.permute.xlu0 %800
      %804 = vset.pattern.permute.xlu0 0
      %805 = vperm.xlu0 %804, %v787
      %v806 = vpop.permute.xlu0 %805
      %809 = vset.pattern.permute.xlu0 0
      %810 = vperm.xlu0 %809, %v788
      %v811 = vpop.permute.xlu0 %810
      %814 = vset.pattern.permute.xlu0 0
      %815 = vperm.xlu0 %814, %v789
      %v816 = vpop.permute.xlu0 %815
      %819 = vset.pattern.permute.xlu0 0
      %820 = vperm.xlu0 %819, %v790
      %v821 = vpop.permute.xlu0 %820
      %824 = vset.pattern.permute.xlu0 0
      %825 = vperm.xlu0 %824, %v791
      %v826 = vpop.permute.xlu0 %825
      %829 = vset.pattern.permute.xlu0 0
      %830 = vperm.xlu0 %829, %v792
      %v831 = vpop.permute.xlu0 %830
      %v833 = vmul.f32 %v796, %v175
      %v834 = vmul.f32 %v801, %v176
      %v835 = vmul.f32 %v806, %v177
      %v836 = vmul.f32 %v811, %v178
      %v837 = vmul.f32 %v816, %v179
      %v838 = vmul.f32 %v821, %v180
      %v839 = vmul.f32 %v826, %v181
      %v840 = vmul.f32 %v831, %v182
      %v841 = vrot.slane %v833, 4
      %v842 = vadd.f32 %v833, %v841
      %v843 = vrot.slane %v842, 2
      %v844 = vadd.f32 %v842, %v843
      %v845 = vrot.slane %v844, 1
      %v846 = vadd.f32 %v844, %v845
      %v847 = vrot.slane %v834, 4
      %v848 = vadd.f32 %v834, %v847
      %v849 = vrot.slane %v848, 2
      %v850 = vadd.f32 %v848, %v849
      %v851 = vrot.slane %v850, 1
      %v852 = vadd.f32 %v850, %v851
      %v853 = vrot.slane %v835, 4
      %v854 = vadd.f32 %v835, %v853
      %v855 = vrot.slane %v854, 2
      %v856 = vadd.f32 %v854, %v855
      %v857 = vrot.slane %v856, 1
      %v858 = vadd.f32 %v856, %v857
      %v859 = vrot.slane %v836, 4
      %v860 = vadd.f32 %v836, %v859
      %v861 = vrot.slane %v860, 2
      %v862 = vadd.f32 %v860, %v861
      %v863 = vrot.slane %v862, 1
      %v864 = vadd.f32 %v862, %v863
      %v865 = vrot.slane %v837, 4
      %v866 = vadd.f32 %v837, %v865
      %v867 = vrot.slane %v866, 2
      %v868 = vadd.f32 %v866, %v867
      %v869 = vrot.slane %v868, 1
      %v870 = vadd.f32 %v868, %v869
      %v871 = vrot.slane %v838, 4
      %v872 = vadd.f32 %v838, %v871
      %v873 = vrot.slane %v872, 2
      %v874 = vadd.f32 %v872, %v873
      %v875 = vrot.slane %v874, 1
      %v876 = vadd.f32 %v874, %v875
      %v877 = vrot.slane %v839, 4
      %v878 = vadd.f32 %v839, %v877
      %v879 = vrot.slane %v878, 2
      %v880 = vadd.f32 %v878, %v879
      %v881 = vrot.slane %v880, 1
      %v882 = vadd.f32 %v880, %v881
      %v883 = vrot.slane %v840, 4
      %v884 = vadd.f32 %v840, %v883
      %v885 = vrot.slane %v884, 2
      %v886 = vadd.f32 %v884, %v885
      %v887 = vrot.slane %v886, 1
      %v888 = vadd.f32 %v886, %v887
      %v889 = vld [vmem:[#allocation12] sm:$0xff]
      %v890 = vld [vmem:[#allocation12 + $0x8] sm:$0xff]
      %v891 = vld [vmem:[#allocation12 + $0x10] sm:$0xff]
      %v892 = vld [vmem:[#allocation12 + $0x18] sm:$0xff]
      %v893 = vld [vmem:[#allocation12 + $0x20] sm:$0xff]
      %v894 = vld [vmem:[#allocation12 + $0x28] sm:$0xff]
      %v895 = vld [vmem:[#allocation12 + $0x30] sm:$0xff]
      %v896 = vld [vmem:[#allocation12 + $0x38] sm:$0xff]
      %v897 = vld [vmem:[#allocation12 + $0x40] sm:$0xff]
      %v898 = vld [vmem:[#allocation12 + $0x48] sm:$0xff]
      %v899 = vld [vmem:[#allocation12 + $0x50] sm:$0xff]
      %v900 = vld [vmem:[#allocation12 + $0x58] sm:$0xff]
      %v901 = vld [vmem:[#allocation12 + $0x60] sm:$0xff]
      %v902 = vld [vmem:[#allocation12 + $0x68] sm:$0xff]
      %v903 = vld [vmem:[#allocation12 + $0x70] sm:$0xff]
      %v904 = vld [vmem:[#allocation12 + $0x78] sm:$0xff]
      %v905 = vld [vmem:[#allocation12 + $0x80] sm:$0xff]
      %v906 = vld [vmem:[#allocation12 + $0x88] sm:$0xff]
      %v907 = vld [vmem:[#allocation12 + $0x90] sm:$0xff]
      %v908 = vld [vmem:[#allocation12 + $0x98] sm:$0xff]
      %v909 = vld [vmem:[#allocation12 + $0xa0] sm:$0xff]
      %v910 = vld [vmem:[#allocation12 + $0xa8] sm:$0xff]
      %v911 = vld [vmem:[#allocation12 + $0xb0] sm:$0xff]
      %v912 = vld [vmem:[#allocation12 + $0xb8] sm:$0xff]
      %v913 = vld [vmem:[#allocation12 + $0xc0] sm:$0xff]
      %v914 = vld [vmem:[#allocation12 + $0xc8] sm:$0xff]
      %v915 = vld [vmem:[#allocation12 + $0xd0] sm:$0xff]
      %v916 = vld [vmem:[#allocation12 + $0xd8] sm:$0xff]
      %v917 = vld [vmem:[#allocation12 + $0xe0] sm:$0xff]
      %v918 = vld [vmem:[#allocation12 + $0xe8] sm:$0xff]
      %v919 = vld [vmem:[#allocation12 + $0xf0] sm:$0xff]
      %v920 = vld [vmem:[#allocation12 + $0xf8] sm:$0xff]
      %v921 = vld [vmem:[#allocation12 + $0x100] sm:$0xff]
      %v922 = vld [vmem:[#allocation12 + $0x108] sm:$0xff]
      %v923 = vld [vmem:[#allocation12 + $0x110] sm:$0xff]
      %v924 = vld [vmem:[#allocation12 + $0x118] sm:$0xff]
      %v925 = vld [vmem:[#allocation12 + $0x120] sm:$0xff]
      %v926 = vld [vmem:[#allocation12 + $0x128] sm:$0xff]
      %v927 = vld [vmem:[#allocation12 + $0x130] sm:$0xff]
      %v928 = vld [vmem:[#allocation12 + $0x138] sm:$0xff]
      %v929 = vld [vmem:[#allocation12 + $0x140] sm:$0xff]
      %v930 = vld [vmem:[#allocation12 + $0x148] sm:$0xff]
      %v931 = vld [vmem:[#allocation12 + $0x150] sm:$0xff]
      %v932 = vld [vmem:[#allocation12 + $0x158] sm:$0xff]
      %v933 = vld [vmem:[#allocation12 + $0x160] sm:$0xff]
      %v934 = vld [vmem:[#allocation12 + $0x168] sm:$0xff]
      %v935 = vld [vmem:[#allocation12 + $0x170] sm:$0xff]
      %v936 = vld [vmem:[#allocation12 + $0x178] sm:$0xff]
      %v937 = vld [vmem:[#allocation14] sm:$0xff]
      %v938 = vld [vmem:[#allocation14 + $0x8] sm:$0xff]
      %v939 = vld [vmem:[#allocation14 + $0x10] sm:$0xff]
      %v940 = vld [vmem:[#allocation14 + $0x18] sm:$0xff]
      %v941 = vld [vmem:[#allocation14 + $0x20] sm:$0xff]
      %v942 = vld [vmem:[#allocation14 + $0x28] sm:$0xff]
      %v943 = vld [vmem:[#allocation14 + $0x30] sm:$0xff]
      %v944 = vld [vmem:[#allocation14 + $0x38] sm:$0xff]
      %v945 = vld [vmem:[#allocation14 + $0x40] sm:$0xff]
      %v946 = vld [vmem:[#allocation14 + $0x48] sm:$0xff]
      %v947 = vld [vmem:[#allocation14 + $0x50] sm:$0xff]
      %v948 = vld [vmem:[#allocation14 + $0x58] sm:$0xff]
      %v949 = vld [vmem:[#allocation14 + $0x60] sm:$0xff]
      %v950 = vld [vmem:[#allocation14 + $0x68] sm:$0xff]
      %v951 = vld [vmem:[#allocation14 + $0x70] sm:$0xff]
      %v952 = vld [vmem:[#allocation14 + $0x78] sm:$0xff]
      %v953 = vld [vmem:[#allocation14 + $0x80] sm:$0xff]
      %v954 = vld [vmem:[#allocation14 + $0x88] sm:$0xff]
      %v955 = vld [vmem:[#allocation14 + $0x90] sm:$0xff]
      %v956 = vld [vmem:[#allocation14 + $0x98] sm:$0xff]
      %v957 = vld [vmem:[#allocation14 + $0xa0] sm:$0xff]
      %v958 = vld [vmem:[#allocation14 + $0xa8] sm:$0xff]
      %v959 = vld [vmem:[#allocation14 + $0xb0] sm:$0xff]
      %v960 = vld [vmem:[#allocation14 + $0xb8] sm:$0xff]
      %v961 = vld [vmem:[#allocation14 + $0xc0] sm:$0xff]
      %v962 = vld [vmem:[#allocation14 + $0xc8] sm:$0xff]
      %v963 = vld [vmem:[#allocation14 + $0xd0] sm:$0xff]
      %v964 = vld [vmem:[#allocation14 + $0xd8] sm:$0xff]
      %v965 = vld [vmem:[#allocation14 + $0xe0] sm:$0xff]
      %v966 = vld [vmem:[#allocation14 + $0xe8] sm:$0xff]
      %v967 = vld [vmem:[#allocation14 + $0xf0] sm:$0xff]
      %v968 = vld [vmem:[#allocation14 + $0xf8] sm:$0xff]
      %v969 = vld [vmem:[#allocation14 + $0x100] sm:$0xff]
      %v970 = vld [vmem:[#allocation14 + $0x108] sm:$0xff]
      %v971 = vld [vmem:[#allocation14 + $0x110] sm:$0xff]
      %v972 = vld [vmem:[#allocation14 + $0x118] sm:$0xff]
      %v973 = vld [vmem:[#allocation14 + $0x120] sm:$0xff]
      %v974 = vld [vmem:[#allocation14 + $0x128] sm:$0xff]
      %v975 = vld [vmem:[#allocation14 + $0x130] sm:$0xff]
      %v976 = vld [vmem:[#allocation14 + $0x138] sm:$0xff]
      %v977 = vld [vmem:[#allocation14 + $0x140] sm:$0xff]
      %v978 = vld [vmem:[#allocation14 + $0x148] sm:$0xff]
      %v979 = vld [vmem:[#allocation14 + $0x150] sm:$0xff]
      %v980 = vld [vmem:[#allocation14 + $0x158] sm:$0xff]
      %v981 = vld [vmem:[#allocation14 + $0x160] sm:$0xff]
      %v982 = vld [vmem:[#allocation14 + $0x168] sm:$0xff]
      %v983 = vld [vmem:[#allocation14 + $0x170] sm:$0xff]
      %v984 = vld [vmem:[#allocation14 + $0x178] sm:$0xff]
      %985 = vmatprep.subr.mxu0 %v983
      %986 = vmatpush1.msra.mxu0 %v982
      %987 = vmatprep.subr.mxu0 %v980
      %988 = vmatpush1.msra.mxu0 %v979
      %989 = vmatprep.subr.mxu0 %v977
      %990 = vmatpush1.msra.mxu0 %v976
      %991 = vmatprep.subr.mxu0 %v974
      %992 = vmatpush1.msra.mxu0 %v973
      %993 = vmatprep.subr.mxu0 %v971
      %994 = vmatpush1.msra.mxu0 %v970
      %995 = vmatprep.subr.mxu0 %v968
      %996 = vmatpush1.msra.mxu0 %v967
      %997 = vmatprep.subr.mxu0 %v965
      %998 = vmatpush1.msra.mxu0 %v964
      %999 = vmatprep.subr.mxu0 %v962
      %1000 = vmatpush1.msra.mxu0 %v961
      %1001 = vmatprep.subr.mxu0 %v959
      %1002 = vmatpush1.msra.mxu0 %v958
      %1003 = vmatprep.subr.mxu0 %v956
      %1004 = vmatpush1.msra.mxu0 %v955
      %1005 = vmatprep.subr.mxu0 %v953
      %1006 = vmatpush1.msra.mxu0 %v952
      %1007 = vmatprep.subr.mxu0 %v950
      %1008 = vmatpush1.msra.mxu0 %v949
      %1009 = vmatprep.subr.mxu0 %v947
      %1010 = vmatpush1.msra.mxu0 %v946
      %1011 = vmatprep.subr.mxu0 %v944
      %1012 = vmatpush1.msra.mxu0 %v943
      %1013 = vmatprep.subr.mxu0 %v941
      %1014 = vmatpush1.msra.mxu0 %v940
      %1015 = vmatprep.subr.mxu0 %v938
      %1016 = vmatpush1.msra.mxu0 %v937
      %1017 = vmatprep.subr.mxu0 0.0
      %1018 = vmatpush2.msra.mxu0 0.0
      %1019 = vmatprep.subr.mxu0 0.0
      %1020 = vmatpush2.msra.mxu0 0.0
      %1021 = vmatprep.subr.mxu0 0.0
      %1022 = vmatpush2.msra.mxu0 0.0
      %1023 = vmatprep.subr.mxu0 0.0
      %1024 = vmatpush2.msra.mxu0 0.0
      %1025 = vmatprep.subr.mxu0 0.0
      %1026 = vmatpush2.msra.mxu0 0.0
      %1027 = vmatprep.subr.mxu0 0.0
      %1028 = vmatpush2.msra.mxu0 0.0
      %1029 = vmatprep.subr.mxu0 0.0
      %1030 = vmatpush2.msra.mxu0 0.0
      %1031 = vmatprep.subr.mxu0 0.0
      %1032 = vmatpush2.msra.mxu0 0.0
      %1033 = vmatprep.subr.mxu0 0.0
      %1034 = vmatpush2.msra.mxu0 0.0
      %1035 = vmatprep.subr.mxu0 0.0
      %1036 = vmatpush2.msra.mxu0 0.0
      %1037 = vmatprep.subr.mxu0 0.0
      %1038 = vmatpush2.msra.mxu0 0.0
      %1039 = vmatprep.subr.mxu0 0.0
      %1040 = vmatpush2.msra.mxu0 0.0
      %1041 = vmatprep.subr.mxu0 0.0
      %1042 = vmatpush2.msra.mxu0 0.0
      %1043 = vmatprep.subr.mxu0 0.0
      %1044 = vmatpush2.msra.mxu0 0.0
      %1045 = vmatprep.subr.mxu0 0.0
      %1046 = vmatpush2.msra.mxu0 0.0
      %1047 = vmatprep.subr.mxu0 0.0
      %1048 = vmatpush2.msra.mxu0 0.0
      %1049 = vmatprep.mubr.f32.mxu0 0.0
      %1050 = vmatmul.mubr.f32.gmra.mxu0 %v174
      %v1051 = vpop.f32.mrf.mxu0
      %v1052 = vadd.f32 0.0, %v1051
      %v1053 = vpop.f32.mrf.mxu0
      %v1054 = vadd.f32 0.0, %v1053
      %1055 = vdwg.mxu0
      %1056 = vmatprep.subr.mxu0 0.0
      %1057 = vmatpush1.msra.mxu0 %v984
      %1058 = vmatprep.subr.mxu0 0.0
      %1059 = vmatpush1.msra.mxu0 %v981
      %1060 = vmatprep.subr.mxu0 0.0
      %1061 = vmatpush1.msra.mxu0 %v978
      %1062 = vmatprep.subr.mxu0 0.0
      %1063 = vmatpush1.msra.mxu0 %v975
      %1064 = vmatprep.subr.mxu0 0.0
      %1065 = vmatpush1.msra.mxu0 %v972
      %1066 = vmatprep.subr.mxu0 0.0
      %1067 = vmatpush1.msra.mxu0 %v969
      %1068 = vmatprep.subr.mxu0 0.0
      %1069 = vmatpush1.msra.mxu0 %v966
      %1070 = vmatprep.subr.mxu0 0.0
      %1071 = vmatpush1.msra.mxu0 %v963
      %1072 = vmatprep.subr.mxu0 0.0
      %1073 = vmatpush1.msra.mxu0 %v960
      %1074 = vmatprep.subr.mxu0 0.0
      %1075 = vmatpush1.msra.mxu0 %v957
      %1076 = vmatprep.subr.mxu0 0.0
      %1077 = vmatpush1.msra.mxu0 %v954
      %1078 = vmatprep.subr.mxu0 0.0
      %1079 = vmatpush1.msra.mxu0 %v951
      %1080 = vmatprep.subr.mxu0 0.0
      %1081 = vmatpush1.msra.mxu0 %v948
      %1082 = vmatprep.subr.mxu0 0.0
      %1083 = vmatpush1.msra.mxu0 %v945
      %1084 = vmatprep.subr.mxu0 0.0
      %1085 = vmatpush1.msra.mxu0 %v942
      %1086 = vmatprep.subr.mxu0 0.0
      %1087 = vmatpush1.msra.mxu0 %v939
      %1088 = vmatprep.subr.mxu0 0.0
      %1089 = vmatpush2.msra.mxu0 0.0
      %1090 = vmatprep.subr.mxu0 0.0
      %1091 = vmatpush2.msra.mxu0 0.0
      %1092 = vmatprep.subr.mxu0 0.0
      %1093 = vmatpush2.msra.mxu0 0.0
      %1094 = vmatprep.subr.mxu0 0.0
      %1095 = vmatpush2.msra.mxu0 0.0
      %1096 = vmatprep.subr.mxu0 0.0
      %1097 = vmatpush2.msra.mxu0 0.0
      %1098 = vmatprep.subr.mxu0 0.0
      %1099 = vmatpush2.msra.mxu0 0.0
      %1100 = vmatprep.subr.mxu0 0.0
      %1101 = vmatpush2.msra.mxu0 0.0
      %1102 = vmatprep.subr.mxu0 0.0
      %1103 = vmatpush2.msra.mxu0 0.0
      %1104 = vmatprep.subr.mxu0 0.0
      %1105 = vmatpush2.msra.mxu0 0.0
      %1106 = vmatprep.subr.mxu0 0.0
      %1107 = vmatpush2.msra.mxu0 0.0
      %1108 = vmatprep.subr.mxu0 0.0
      %1109 = vmatpush2.msra.mxu0 0.0
      %1110 = vmatprep.subr.mxu0 0.0
      %1111 = vmatpush2.msra.mxu0 0.0
      %1112 = vmatprep.subr.mxu0 0.0
      %1113 = vmatpush2.msra.mxu0 0.0
      %1114 = vmatprep.subr.mxu0 0.0
      %1115 = vmatpush2.msra.mxu0 0.0
      %1116 = vmatprep.subr.mxu0 0.0
      %1117 = vmatpush2.msra.mxu0 0.0
      %1118 = vmatprep.subr.mxu0 0.0
      %1119 = vmatpush2.msra.mxu0 0.0
      %1120 = vmatprep.mubr.f32.mxu0 0.0
      %1121 = vmatmul.mubr.f32.gmra.mxu0 %v174
      %v1122 = vpop.f32.mrf.mxu0
      %v1123 = vadd.f32 0.0, %v1122
      %v1124 = vpop.f32.mrf.mxu0
      %1125 = vdwg.mxu0
      %v1134 = vsel %vm584, %v852, %v846
      %v1135 = vsel %vm586, %v858, %v1134
      %v1136 = vsel %vm588, %v864, %v1135
      %v1137 = vsel %vm590, %v870, %v1136
      %v1138 = vsel %vm592, %v876, %v1137
      %v1139 = vsel %vm594, %v882, %v1138
      %v1140 = vsel %vm596, %v888, %v1139
      %1142 = vmatprep.subr.mxu0 %v935
      %1143 = vmatpush1.msra.mxu0 %v934
      %1144 = vmatprep.subr.mxu0 %v932
      %1145 = vmatpush1.msra.mxu0 %v931
      %1146 = vmatprep.subr.mxu0 %v929
      %1147 = vmatpush1.msra.mxu0 %v928
      %1148 = vmatprep.subr.mxu0 %v926
      %1149 = vmatpush1.msra.mxu0 %v925
      %1150 = vmatprep.subr.mxu0 %v923
      %1151 = vmatpush1.msra.mxu0 %v922
      %1152 = vmatprep.subr.mxu0 %v920
      %1153 = vmatpush1.msra.mxu0 %v919
      %1154 = vmatprep.subr.mxu0 %v917
      %1155 = vmatpush1.msra.mxu0 %v916
      %1156 = vmatprep.subr.mxu0 %v914
      %1157 = vmatpush1.msra.mxu0 %v913
      %1158 = vmatprep.subr.mxu0 %v911
      %1159 = vmatpush1.msra.mxu0 %v910
      %1160 = vmatprep.subr.mxu0 %v908
      %1161 = vmatpush1.msra.mxu0 %v907
      %1162 = vmatprep.subr.mxu0 %v905
      %1163 = vmatpush1.msra.mxu0 %v904
      %1164 = vmatprep.subr.mxu0 %v902
      %1165 = vmatpush1.msra.mxu0 %v901
      %1166 = vmatprep.subr.mxu0 %v899
      %1167 = vmatpush1.msra.mxu0 %v898
      %1168 = vmatprep.subr.mxu0 %v896
      %1169 = vmatpush1.msra.mxu0 %v895
      %1170 = vmatprep.subr.mxu0 %v893
      %1171 = vmatpush1.msra.mxu0 %v892
      %1172 = vmatprep.subr.mxu0 %v890
      %1173 = vmatpush1.msra.mxu0 %v889
      %1174 = vmatprep.subr.mxu0 0.0
      %1175 = vmatpush2.msra.mxu0 0.0
      %1176 = vmatprep.subr.mxu0 0.0
      %1177 = vmatpush2.msra.mxu0 0.0
      %1178 = vmatprep.subr.mxu0 0.0
      %1179 = vmatpush2.msra.mxu0 0.0
      %1180 = vmatprep.subr.mxu0 0.0
      %1181 = vmatpush2.msra.mxu0 0.0
      %1182 = vmatprep.subr.mxu0 0.0
      %1183 = vmatpush2.msra.mxu0 0.0
      %1184 = vmatprep.subr.mxu0 0.0
      %1185 = vmatpush2.msra.mxu0 0.0
      %1186 = vmatprep.subr.mxu0 0.0
      %1187 = vmatpush2.msra.mxu0 0.0
      %1188 = vmatprep.subr.mxu0 0.0
      %1189 = vmatpush2.msra.mxu0 0.0
      %1190 = vmatprep.subr.mxu0 0.0
      %1191 = vmatpush2.msra.mxu0 0.0
      %1192 = vmatprep.subr.mxu0 0.0
      %1193 = vmatpush2.msra.mxu0 0.0
      %1194 = vmatprep.subr.mxu0 0.0
      %1195 = vmatpush2.msra.mxu0 0.0
      %1196 = vmatprep.subr.mxu0 0.0
      %1197 = vmatpush2.msra.mxu0 0.0
      %1198 = vmatprep.subr.mxu0 0.0
      %1199 = vmatpush2.msra.mxu0 0.0
      %1200 = vmatprep.subr.mxu0 0.0
      %1201 = vmatpush2.msra.mxu0 0.0
      %1202 = vmatprep.subr.mxu0 0.0
      %1203 = vmatpush2.msra.mxu0 0.0
      %1204 = vmatprep.subr.mxu0 0.0
      %1205 = vmatpush2.msra.mxu0 0.0
      %1206 = vmatprep.mubr.f32.mxu0 0.0
      %1207 = vmatmul.mubr.f32.gmra.mxu0 %v1140
      %v1208 = vpop.f32.mrf.mxu0
      %v1209 = vadd.f32 %v1052, %v1208
      %v1210 = vpop.f32.mrf.mxu0
      %v1211 = vadd.f32 %v1054, %v1210
      %1212 = vdwg.mxu0
      %1213 = vmatprep.subr.mxu0 0.0
      %1214 = vmatpush1.msra.mxu0 %v936
      %1215 = vmatprep.subr.mxu0 0.0
      %1216 = vmatpush1.msra.mxu0 %v933
      %1217 = vmatprep.subr.mxu0 0.0
      %1218 = vmatpush1.msra.mxu0 %v930
      %1219 = vmatprep.subr.mxu0 0.0
      %1220 = vmatpush1.msra.mxu0 %v927
      %1221 = vmatprep.subr.mxu0 0.0
      %1222 = vmatpush1.msra.mxu0 %v924
      %1223 = vmatprep.subr.mxu0 0.0
      %1224 = vmatpush1.msra.mxu0 %v921
      %1225 = vmatprep.subr.mxu0 0.0
      %1226 = vmatpush1.msra.mxu0 %v918
      %1227 = vmatprep.subr.mxu0 0.0
      %1228 = vmatpush1.msra.mxu0 %v915
      %1229 = vmatprep.subr.mxu0 0.0
      %1230 = vmatpush1.msra.mxu0 %v912
      %1231 = vmatprep.subr.mxu0 0.0
      %1232 = vmatpush1.msra.mxu0 %v909
      %1233 = vmatprep.subr.mxu0 0.0
      %1234 = vmatpush1.msra.mxu0 %v906
      %1235 = vmatprep.subr.mxu0 0.0
      %1236 = vmatpush1.msra.mxu0 %v903
      %1237 = vmatprep.subr.mxu0 0.0
      %1238 = vmatpush1.msra.mxu0 %v900
      %1239 = vmatprep.subr.mxu0 0.0
      %1240 = vmatpush1.msra.mxu0 %v897
      %1241 = vmatprep.subr.mxu0 0.0
      %1242 = vmatpush1.msra.mxu0 %v894
      %1243 = vmatprep.subr.mxu0 0.0
      %1244 = vmatpush1.msra.mxu0 %v891
      %1245 = vmatprep.subr.mxu0 0.0
      %1246 = vmatpush2.msra.mxu0 0.0
      %1247 = vmatprep.subr.mxu0 0.0
      %1248 = vmatpush2.msra.mxu0 0.0
      %1249 = vmatprep.subr.mxu0 0.0
      %1250 = vmatpush2.msra.mxu0 0.0
      %1251 = vmatprep.subr.mxu0 0.0
      %1252 = vmatpush2.msra.mxu0 0.0
      %1253 = vmatprep.subr.mxu0 0.0
      %1254 = vmatpush2.msra.mxu0 0.0
      %1255 = vmatprep.subr.mxu0 0.0
      %1256 = vmatpush2.msra.mxu0 0.0
      %1257 = vmatprep.subr.mxu0 0.0
      %1258 = vmatpush2.msra.mxu0 0.0
      %1259 = vmatprep.subr.mxu0 0.0
      %1260 = vmatpush2.msra.mxu0 0.0
      %1261 = vmatprep.subr.mxu0 0.0
      %1262 = vmatpush2.msra.mxu0 0.0
      %1263 = vmatprep.subr.mxu0 0.0
      %1264 = vmatpush2.msra.mxu0 0.0
      %1265 = vmatprep.subr.mxu0 0.0
      %1266 = vmatpush2.msra.mxu0 0.0
      %1267 = vmatprep.subr.mxu0 0.0
      %1268 = vmatpush2.msra.mxu0 0.0
      %1269 = vmatprep.subr.mxu0 0.0
      %1270 = vmatpush2.msra.mxu0 0.0
      %1271 = vmatprep.subr.mxu0 0.0
      %1272 = vmatpush2.msra.mxu0 0.0
      %1273 = vmatprep.subr.mxu0 0.0
      %1274 = vmatpush2.msra.mxu0 0.0
      %1275 = vmatprep.subr.mxu0 0.0
      %1276 = vmatpush2.msra.mxu0 0.0
      %1277 = vmatprep.mubr.f32.mxu0 0.0
      %1278 = vmatmul.mubr.f32.gmra.mxu0 %v1140
      %v1279 = vpop.f32.mrf.mxu0
      %v1280 = vadd.f32 %v1123, %v1279
      %v1281 = vpop.f32.mrf.mxu0
      %1282 = vdwg.mxu0
      %v1283 = vld [vmem:[%s10] sm:$0x7]
      %v1285 = vlaneseq
      %v1286 = vshrl.u32 %v1285, 7
      %v1287 = vsub.s32 0, %v1286
      %v1288 = vrot.slane %v1283, %v1287
      %v1289 = vlaneseq
      %v1290 = vshrl.u32 %v1289, 7
      %v1291 = vsub.s32 1, %v1290
      %v1292 = vrot.slane %v1283, %v1291
      %v1293 = vlaneseq
      %v1294 = vshrl.u32 %v1293, 7
      %v1295 = vsub.s32 2, %v1294
      %v1296 = vrot.slane %v1283, %v1295
      %v1300 = vadd.f32 %v1209, %v1288
      %v1301 = vadd.f32 %v1211, %v1292
      %v1302 = vadd.f32 %v1280, %v1296
      %v1303 = vld [vmem:[#allocation15] sm:$0xff]
      %v1304 = vld [vmem:[#allocation15 + $0x8] sm:$0xff]
      %v1305 = vld [vmem:[#allocation15 + $0x10] sm:$0xff]
      %v1306 = vld [vmem:[#allocation15 + $0x18] sm:$0xff]
      %v1307 = vld [vmem:[#allocation15 + $0x20] sm:$0xff]
      %v1308 = vld [vmem:[#allocation15 + $0x28] sm:$0xff]
      %v1309 = vld [vmem:[#allocation15 + $0x30] sm:$0xff]
      %v1310 = vld [vmem:[#allocation15 + $0x38] sm:$0xff]
      %v1311 = vld [vmem:[#allocation15 + $0x40] sm:$0xff]
      %v1312 = vld [vmem:[#allocation15 + $0x48] sm:$0xff]
      %v1313 = vld [vmem:[#allocation15 + $0x50] sm:$0xff]
      %v1314 = vld [vmem:[#allocation15 + $0x58] sm:$0xff]
      %v1315 = vld [vmem:[#allocation15 + $0x60] sm:$0xff]
      %v1316 = vld [vmem:[#allocation15 + $0x68] sm:$0xff]
      %v1317 = vld [vmem:[#allocation15 + $0x70] sm:$0xff]
      %v1318 = vld [vmem:[#allocation15 + $0x78] sm:$0xff]
      %v1319 = vld [vmem:[#allocation15 + $0x80] sm:$0xff]
      %v1320 = vld [vmem:[#allocation15 + $0x88] sm:$0xff]
      %v1321 = vld [vmem:[#allocation15 + $0x90] sm:$0xff]
      %v1322 = vld [vmem:[#allocation15 + $0x98] sm:$0xff]
      %v1323 = vld [vmem:[#allocation15 + $0xa0] sm:$0xff]
      %v1324 = vld [vmem:[#allocation15 + $0xa8] sm:$0xff]
      %v1325 = vld [vmem:[#allocation15 + $0xb0] sm:$0xff]
      %v1326 = vld [vmem:[#allocation15 + $0xb8] sm:$0xff]
      %v1327 = vld [vmem:[#allocation15 + $0xc0] sm:$0xff]
      %v1328 = vld [vmem:[#allocation15 + $0xc8] sm:$0xff]
      %v1329 = vld [vmem:[#allocation15 + $0xd0] sm:$0xff]
      %v1330 = vld [vmem:[#allocation15 + $0xd8] sm:$0xff]
      %v1331 = vld [vmem:[#allocation15 + $0xe0] sm:$0xff]
      %v1332 = vld [vmem:[#allocation15 + $0xe8] sm:$0xff]
      %v1333 = vld [vmem:[#allocation15 + $0xf0] sm:$0xff]
      %v1334 = vld [vmem:[#allocation15 + $0xf8] sm:$0xff]
      %v1335 = vld [vmem:[#allocation15 + $0x100] sm:$0xff]
      %v1336 = vld [vmem:[#allocation15 + $0x108] sm:$0xff]
      %v1337 = vld [vmem:[#allocation15 + $0x110] sm:$0xff]
      %v1338 = vld [vmem:[#allocation15 + $0x118] sm:$0xff]
      %v1339 = vld [vmem:[#allocation15 + $0x120] sm:$0xff]
      %v1340 = vld [vmem:[#allocation15 + $0x128] sm:$0xff]
      %v1341 = vld [vmem:[#allocation15 + $0x130] sm:$0xff]
      %v1342 = vld [vmem:[#allocation15 + $0x138] sm:$0xff]
      %v1343 = vld [vmem:[#allocation15 + $0x140] sm:$0xff]
      %v1344 = vld [vmem:[#allocation15 + $0x148] sm:$0xff]
      %v1345 = vld [vmem:[#allocation15 + $0x150] sm:$0xff]
      %v1346 = vld [vmem:[#allocation15 + $0x158] sm:$0xff]
      %v1347 = vld [vmem:[#allocation15 + $0x160] sm:$0xff]
      %v1348 = vld [vmem:[#allocation15 + $0x168] sm:$0xff]
      %v1349 = vld [vmem:[#allocation15 + $0x170] sm:$0xff]
      %v1350 = vld [vmem:[#allocation15 + $0x178] sm:$0xff]
      %v1351 = vld [vmem:[%s11] sm:$0x7]
      %v1353 = vlaneseq
      %v1354 = vshrl.u32 %v1353, 7
      %v1355 = vsub.s32 0, %v1354
      %v1356 = vrot.slane %v1351, %v1355
      %v1357 = vlaneseq
      %v1358 = vshrl.u32 %v1357, 7
      %v1359 = vsub.s32 1, %v1358
      %v1360 = vrot.slane %v1351, %v1359
      %v1361 = vlaneseq
      %v1362 = vshrl.u32 %v1361, 7
      %v1363 = vsub.s32 2, %v1362
      %v1364 = vrot.slane %v1351, %v1363
      %1368 = vmatprep.subr.mxu0 %v1349
      %1369 = vmatpush1.msra.mxu0 %v1348
      %1370 = vmatprep.subr.mxu0 %v1346
      %1371 = vmatpush1.msra.mxu0 %v1345
      %1372 = vmatprep.subr.mxu0 %v1343
      %1373 = vmatpush1.msra.mxu0 %v1342
      %1374 = vmatprep.subr.mxu0 %v1340
      %1375 = vmatpush1.msra.mxu0 %v1339
      %1376 = vmatprep.subr.mxu0 %v1337
      %1377 = vmatpush1.msra.mxu0 %v1336
      %1378 = vmatprep.subr.mxu0 %v1334
      %1379 = vmatpush1.msra.mxu0 %v1333
      %1380 = vmatprep.subr.mxu0 %v1331
      %1381 = vmatpush1.msra.mxu0 %v1330
      %1382 = vmatprep.subr.mxu0 %v1328
      %1383 = vmatpush1.msra.mxu0 %v1327
      %1384 = vmatprep.subr.mxu0 %v1325
      %1385 = vmatpush1.msra.mxu0 %v1324
      %1386 = vmatprep.subr.mxu0 %v1322
      %1387 = vmatpush1.msra.mxu0 %v1321
      %1388 = vmatprep.subr.mxu0 %v1319
      %1389 = vmatpush1.msra.mxu0 %v1318
      %1390 = vmatprep.subr.mxu0 %v1316
      %1391 = vmatpush1.msra.mxu0 %v1315
      %1392 = vmatprep.subr.mxu0 %v1313
      %1393 = vmatpush1.msra.mxu0 %v1312
      %1394 = vmatprep.subr.mxu0 %v1310
      %1395 = vmatpush1.msra.mxu0 %v1309
      %1396 = vmatprep.subr.mxu0 %v1307
      %1397 = vmatpush1.msra.mxu0 %v1306
      %1398 = vmatprep.subr.mxu0 %v1304
      %1399 = vmatpush1.msra.mxu0 %v1303
      %1400 = vmatprep.subr.mxu0 0.0
      %1401 = vmatpush2.msra.mxu0 0.0
      %1402 = vmatprep.subr.mxu0 0.0
      %1403 = vmatpush2.msra.mxu0 0.0
      %1404 = vmatprep.subr.mxu0 0.0
      %1405 = vmatpush2.msra.mxu0 0.0
      %1406 = vmatprep.subr.mxu0 0.0
      %1407 = vmatpush2.msra.mxu0 0.0
      %1408 = vmatprep.subr.mxu0 0.0
      %1409 = vmatpush2.msra.mxu0 0.0
      %1410 = vmatprep.subr.mxu0 0.0
      %1411 = vmatpush2.msra.mxu0 0.0
      %1412 = vmatprep.subr.mxu0 0.0
      %1413 = vmatpush2.msra.mxu0 0.0
      %1414 = vmatprep.subr.mxu0 0.0
      %1415 = vmatpush2.msra.mxu0 0.0
      %1416 = vmatprep.subr.mxu0 0.0
      %1417 = vmatpush2.msra.mxu0 0.0
      %1418 = vmatprep.subr.mxu0 0.0
      %1419 = vmatpush2.msra.mxu0 0.0
      %1420 = vmatprep.subr.mxu0 0.0
      %1421 = vmatpush2.msra.mxu0 0.0
      %1422 = vmatprep.subr.mxu0 0.0
      %1423 = vmatpush2.msra.mxu0 0.0
      %1424 = vmatprep.subr.mxu0 0.0
      %1425 = vmatpush2.msra.mxu0 0.0
      %1426 = vmatprep.subr.mxu0 0.0
      %1427 = vmatpush2.msra.mxu0 0.0
      %1428 = vmatprep.subr.mxu0 0.0
      %1429 = vmatpush2.msra.mxu0 0.0
      %1430 = vmatprep.subr.mxu0 0.0
      %1431 = vmatpush2.msra.mxu0 0.0
      %1432 = vmatprep.mubr.f32.mxu0 0.0
      %1433 = vmatmul.mubr.f32.gmra.mxu0 %v173
      %v1434 = vpop.f32.mrf.mxu0
      %v1435 = vadd.f32 %v1356, %v1434
      %v1436 = vpop.f32.mrf.mxu0
      %v1437 = vadd.f32 %v1360, %v1436
      %1438 = vdwg.mxu0
      %1439 = vmatprep.subr.mxu0 0.0
      %1440 = vmatpush1.msra.mxu0 %v1350
      %1441 = vmatprep.subr.mxu0 0.0
      %1442 = vmatpush1.msra.mxu0 %v1347
      %1443 = vmatprep.subr.mxu0 0.0
      %1444 = vmatpush1.msra.mxu0 %v1344
      %1445 = vmatprep.subr.mxu0 0.0
      %1446 = vmatpush1.msra.mxu0 %v1341
      %1447 = vmatprep.subr.mxu0 0.0
      %1448 = vmatpush1.msra.mxu0 %v1338
      %1449 = vmatprep.subr.mxu0 0.0
      %1450 = vmatpush1.msra.mxu0 %v1335
      %1451 = vmatprep.subr.mxu0 0.0
      %1452 = vmatpush1.msra.mxu0 %v1332
      %1453 = vmatprep.subr.mxu0 0.0
      %1454 = vmatpush1.msra.mxu0 %v1329
      %1455 = vmatprep.subr.mxu0 0.0
      %1456 = vmatpush1.msra.mxu0 %v1326
      %1457 = vmatprep.subr.mxu0 0.0
      %1458 = vmatpush1.msra.mxu0 %v1323
      %1459 = vmatprep.subr.mxu0 0.0
      %1460 = vmatpush1.msra.mxu0 %v1320
      %1461 = vmatprep.subr.mxu0 0.0
      %1462 = vmatpush1.msra.mxu0 %v1317
      %1463 = vmatprep.subr.mxu0 0.0
      %1464 = vmatpush1.msra.mxu0 %v1314
      %1465 = vmatprep.subr.mxu0 0.0
      %1466 = vmatpush1.msra.mxu0 %v1311
      %1467 = vmatprep.subr.mxu0 0.0
      %1468 = vmatpush1.msra.mxu0 %v1308
      %1469 = vmatprep.subr.mxu0 0.0
      %1470 = vmatpush1.msra.mxu0 %v1305
      %1471 = vmatprep.subr.mxu0 0.0
      %1472 = vmatpush2.msra.mxu0 0.0
      %1473 = vmatprep.subr.mxu0 0.0
      %1474 = vmatpush2.msra.mxu0 0.0
      %1475 = vmatprep.subr.mxu0 0.0
      %1476 = vmatpush2.msra.mxu0 0.0
      %1477 = vmatprep.subr.mxu0 0.0
      %1478 = vmatpush2.msra.mxu0 0.0
      %1479 = vmatprep.subr.mxu0 0.0
      %1480 = vmatpush2.msra.mxu0 0.0
      %1481 = vmatprep.subr.mxu0 0.0
      %1482 = vmatpush2.msra.mxu0 0.0
      %1483 = vmatprep.subr.mxu0 0.0
      %1484 = vmatpush2.msra.mxu0 0.0
      %1485 = vmatprep.subr.mxu0 0.0
      %1486 = vmatpush2.msra.mxu0 0.0
      %1487 = vmatprep.subr.mxu0 0.0
      %1488 = vmatpush2.msra.mxu0 0.0
      %1489 = vmatprep.subr.mxu0 0.0
      %1490 = vmatpush2.msra.mxu0 0.0
      %1491 = vmatprep.subr.mxu0 0.0
      %1492 = vmatpush2.msra.mxu0 0.0
      %1493 = vmatprep.subr.mxu0 0.0
      %1494 = vmatpush2.msra.mxu0 0.0
      %1495 = vmatprep.subr.mxu0 0.0
      %1496 = vmatpush2.msra.mxu0 0.0
      %1497 = vmatprep.subr.mxu0 0.0
      %1498 = vmatpush2.msra.mxu0 0.0
      %1499 = vmatprep.subr.mxu0 0.0
      %1500 = vmatpush2.msra.mxu0 0.0
      %1501 = vmatprep.subr.mxu0 0.0
      %1502 = vmatpush2.msra.mxu0 0.0
      %1503 = vmatprep.mubr.f32.mxu0 0.0
      %1504 = vmatmul.mubr.f32.gmra.mxu0 %v173
      %v1505 = vpop.f32.mrf.mxu0
      %v1506 = vadd.f32 %v1364, %v1505
      %v1507 = vpop.f32.mrf.mxu0
      %1508 = vdwg.mxu0
      %v1509 = vadd.f32 %v1300, %v1435
      %v1510 = vxor.u32 %v1509, 2147483648
      %v1511 = vmul.f32 %v1510, 1.442695
      %v1512 = vpow.pop %v1511
      %v1513 = vadd.f32 %v1512, 1.0
      %v1514 = vrcp.pop %v1513
      %v1515 = vmul.f32 1.0, %v1514
      %v1516 = vadd.f32 %v1301, %v1437
      %v1517 = vxor.u32 %v1516, 2147483648
      %v1518 = vmul.f32 %v1517, 1.442695
      %v1519 = vpow.pop %v1518
      %v1520 = vadd.f32 %v1519, 1.0
      %v1521 = vrcp.pop %v1520
      %v1522 = vmul.f32 1.0, %v1521
      %v1523 = vmul.f32 %v1515, %v1506
      %v1524 = vadd.f32 %v1302, %v1523
      %v1525 = vtanh.pop %v1524
      %v1526 = vsub.f32 1.0, %v1522
      %v1527 = vmul.f32 %v1526, %v1525
      %v1528 = vmul.f32 %v1522, %v173
      %v1529 = vadd.f32 %v1527, %v1528
      %1530 = vst [vmem:[#allocation2] sm:$0xff] %v1529
      %1531 = vst [vmem:[#allocation19] sm:$0xff] %v1529
    $region97: #{tpu_custom_call.1} parent=1 // pred_fallthru
      _
    %v1532 = vld [vmem:[#allocation2] sm:$0xff]
    %v1533 = vld [vmem:[#allocation17] sm:$0xff]
    %v1534 = vld [vmem:[#allocation17 + $0x8] sm:$0xff]
    %v1535 = vld [vmem:[#allocation17 + $0x10] sm:$0xff]
    %v1536 = vld [vmem:[#allocation17 + $0x18] sm:$0xff]
    %v1537 = vld [vmem:[#allocation17 + $0x20] sm:$0xff]
    %v1538 = vld [vmem:[#allocation17 + $0x28] sm:$0xff]
    %v1539 = vld [vmem:[#allocation17 + $0x30] sm:$0xff]
    %v1540 = vld [vmem:[#allocation17 + $0x38] sm:$0xff]
    %v1541 = vld [vmem:[#allocation17 + $0x40] sm:$0xff]
    %v1542 = vld [vmem:[#allocation17 + $0x48] sm:$0xff]
    %v1543 = vld [vmem:[#allocation17 + $0x50] sm:$0xff]
    %v1544 = vld [vmem:[#allocation17 + $0x58] sm:$0xff]
    %v1545 = vld [vmem:[#allocation17 + $0x60] sm:$0xff]
    %v1546 = vld [vmem:[#allocation17 + $0x68] sm:$0xff]
    %v1547 = vld [vmem:[#allocation17 + $0x70] sm:$0xff]
    %v1548 = vld [vmem:[#allocation17 + $0x78] sm:$0xff]
    %v1549 = vld [vmem:[%s13] sm:$0x1]
    %v1551 = vlaneseq
    %v1552 = vshrl.u32 %v1551, 7
    %v1553 = vsub.s32 0, %v1552
    %v1554 = vrot.slane %v1549, %v1553
    %1556 = vmatprep.subr.mxu0 0.0
    %1557 = vmatpush1.msra.mxu0 %v1548
    %1558 = vmatprep.subr.mxu0 0.0
    %1559 = vmatpush1.msra.mxu0 %v1547
    %1560 = vmatprep.subr.mxu0 0.0
    %1561 = vmatpush1.msra.mxu0 %v1546
    %1562 = vmatprep.subr.mxu0 0.0
    %1563 = vmatpush1.msra.mxu0 %v1545
    %1564 = vmatprep.subr.mxu0 0.0
    %1565 = vmatpush1.msra.mxu0 %v1544
    %1566 = vmatprep.subr.mxu0 0.0
    %1567 = vmatpush1.msra.mxu0 %v1543
    %1568 = vmatprep.subr.mxu0 0.0
    %1569 = vmatpush1.msra.mxu0 %v1542
    %1570 = vmatprep.subr.mxu0 0.0
    %1571 = vmatpush1.msra.mxu0 %v1541
    %1572 = vmatprep.subr.mxu0 0.0
    %1573 = vmatpush1.msra.mxu0 %v1540
    %1574 = vmatprep.subr.mxu0 0.0
    %1575 = vmatpush1.msra.mxu0 %v1539
    %1576 = vmatprep.subr.mxu0 0.0
    %1577 = vmatpush1.msra.mxu0 %v1538
    %1578 = vmatprep.subr.mxu0 0.0
    %1579 = vmatpush1.msra.mxu0 %v1537
    %1580 = vmatprep.subr.mxu0 0.0
    %1581 = vmatpush1.msra.mxu0 %v1536
    %1582 = vmatprep.subr.mxu0 0.0
    %1583 = vmatpush1.msra.mxu0 %v1535
    %1584 = vmatprep.subr.mxu0 0.0
    %1585 = vmatpush1.msra.mxu0 %v1534
    %1586 = vmatprep.subr.mxu0 0.0
    %1587 = vmatpush1.msra.mxu0 %v1533
    %1588 = vmatprep.subr.mxu0 0.0
    %1589 = vmatpush2.msra.mxu0 0.0
    %1590 = vmatprep.subr.mxu0 0.0
    %1591 = vmatpush2.msra.mxu0 0.0
    %1592 = vmatprep.subr.mxu0 0.0
    %1593 = vmatpush2.msra.mxu0 0.0
    %1594 = vmatprep.subr.mxu0 0.0
    %1595 = vmatpush2.msra.mxu0 0.0
    %1596 = vmatprep.subr.mxu0 0.0
    %1597 = vmatpush2.msra.mxu0 0.0
    %1598 = vmatprep.subr.mxu0 0.0
    %1599 = vmatpush2.msra.mxu0 0.0
    %1600 = vmatprep.subr.mxu0 0.0
    %1601 = vmatpush2.msra.mxu0 0.0
    %1602 = vmatprep.subr.mxu0 0.0
    %1603 = vmatpush2.msra.mxu0 0.0
    %1604 = vmatprep.subr.mxu0 0.0
    %1605 = vmatpush2.msra.mxu0 0.0
    %1606 = vmatprep.subr.mxu0 0.0
    %1607 = vmatpush2.msra.mxu0 0.0
    %1608 = vmatprep.subr.mxu0 0.0
    %1609 = vmatpush2.msra.mxu0 0.0
    %1610 = vmatprep.subr.mxu0 0.0
    %1611 = vmatpush2.msra.mxu0 0.0
    %1612 = vmatprep.subr.mxu0 0.0
    %1613 = vmatpush2.msra.mxu0 0.0
    %1614 = vmatprep.subr.mxu0 0.0
    %1615 = vmatpush2.msra.mxu0 0.0
    %1616 = vmatprep.subr.mxu0 0.0
    %1617 = vmatpush2.msra.mxu0 0.0
    %1618 = vmatprep.subr.mxu0 0.0
    %1619 = vmatpush2.msra.mxu0 0.0
    %1620 = vmatprep.mubr.f32.mxu0 0.0
    %1621 = vmatmul.mubr.f32.gmra.mxu0 %v1532
    %v1622 = vpop.f32.mrf.mxu0
    %v1623 = vadd.f32 %v1554, %v1622
    %v1624 = vpop.f32.mrf.mxu0
    %1625 = vdwg.mxu0
    %1626 = vst [vmem:[#allocation18] sm:$0xff] %v1623
    // Predicated region
    $region98: #{tpu_custom_call.1} parent=1 // pred_check
      _
    $region99: #{tpu_custom_call.1} parent=1 // pred_check_branch
      %1628 = sbr.rel (0) target = $region101
    $region100: #{tpu_custom_call.1} parent=1 // pred_region
      %s1630 = ssub.s32 128, 128
      %1631 = vsyncadd [#allocation5], %s1630
      %s1633 = sshll.u32 [#allocation18], 4
      %s1634 = int_to_ptr.vmem [resolvable:$true] %s1633
      %1636 = dma.vmem_to_hbm [thread:$0]  %s1634, 128, %s14, [#allocation5]
    $region101: #{tpu_custom_call.1} parent=1 // pred_fallthru
      _
    // Predicated region
    $region102: #{tpu_custom_call.1} parent=1 // pred_check
      _
    $region103: #{tpu_custom_call.1} parent=1 // pred_check_branch
      %1638 = sbr.rel (0) target = $region105
    $region104: #{tpu_custom_call.1} parent=1 // pred_region
      %s1640 = ssub.s32 128, 128
      %1641 = vsyncadd [#allocation20], %s1640
      %s1643 = sshll.u32 [#allocation19], 4
      %s1644 = int_to_ptr.vmem [resolvable:$true] %s1643
      %1646 = dma.vmem_to_hbm [thread:$0]  %s1644, 128, %s15, [#allocation20]
    $region105: #{tpu_custom_call.1} parent=1 // pred_fallthru
      _
    // Predicated region
    $region106: #{tpu_custom_call.1} parent=1 // pred_check
      _
    $region107: #{tpu_custom_call.1} parent=1 // pred_check_branch
      %1648 = sbr.rel (0) target = $region109
    $region108: #{tpu_custom_call.1} parent=1 // pred_region
      %1649 = dma.done [#allocation5], 128
    $region109: #{tpu_custom_call.1} parent=1 // pred_fallthru
      _
    // Predicated region
    $region110: #{tpu_custom_call.1} parent=1 // pred_check
      _
    $region111: #{tpu_custom_call.1} parent=1 // pred_check_branch
      %1651 = sbr.rel (0) target = $region113
    $region112: #{tpu_custom_call.1} parent=1 // pred_region
      %1652 = dma.done [#allocation20], 128
    $region113: #{tpu_custom_call.1} parent=1 // pred_fallthru
      _
    %1653 = vsyncpa [#allocation4], 1
    %1654 = vsyncpa [#allocation7], 1
    %1655 = vsyncpa [#allocation10], 1
    %1656 = vsyncpa [#allocation13], 1
    %1657 = vsyncpa [#allocation16], 1
    %1658 = vsyncpa [#allocation5], 1
    %1659 = vsyncpa [#allocation20], 1

</llo_original>
